<compile_context>
chip_gen: v7x
topology: tpu7x:2x2x1
jax: 0.10.0
libtpu: 0.0.40
codegen_flags: <defaults>
</compile_context>

<pallas_src>
import functools

import jax
import jax.numpy as jnp
from jax import lax
from jax.experimental import pallas as pl
from jax.experimental.pallas import tpu as pltpu

NEG_SLOPE = 0.01        # nn.LeakyReLU default
EPS = 1e-5              # nn.InstanceNorm2d default

LANE = 128              # TPU lane width
PAD = 128               # zero guard band on each side of the flattened spatial axis


def _resblock_kernel(x_ref, w1_ref, g1_ref, be1_ref, w2_ref, g2_ref, be2_ref,
                     out_ref, slab_ref, patch_ref, *, H, W, C):
    """Fused ResBlock for one batch element (channel-major, lane-dense).

    x_ref      : (1, C, H*W)        input tile, spatial flattened on lanes
    w1/w2_ref  : (C, 9*C)           conv weights, columns ordered (kr*3+kc)*C + ci
    g*/be*_ref : (C, 1)             InstanceNorm gamma / beta
    out_ref    : (1, C, H*W)        output tile
    slab_ref   : (C, PAD+H*W+PAD)   VMEM scratch: [zeros | activation | zeros]
    patch_ref  : (9*C, H*W)         VMEM scratch: im2col matrix
    """
    HW = H * W

    # Column-boundary masks for the dx = -1 / +1 taps (zero padding in W).
    col = lax.broadcasted_iota(jnp.int32, (1, HW), 1) % W
    mask_l = (col > 0).astype(jnp.float32)        # x-1 inside the image
    mask_r = (col < W - 1).astype(jnp.float32)    # x+1 inside the image

    # Zero guard bands: written once per step; the interior overwrite below
    # never touches them, so they stay valid for both convs.  PAD >= W+1, so
    # every dy=+-1 / dx=+-1 shifted read of an out-of-image row lands here.
    slab_ref[:, :PAD] = jnp.zeros((C, PAD), jnp.float32)
    slab_ref[:, PAD + HW:] = jnp.zeros((C, PAD), jnp.float32)

    def conv_in_lrelu(w_ref, g_ref, be_ref):
        # im2col: 9 shifted FULL-WIDTH lane reads of the guarded slab; the six
        # dx=+-1 taps get a cheap VPU boundary mask.  All patch writes are
        # (C, HW) aligned full-tile stores (sublane offset k*C, 2 lane tiles).
        for kr in range(3):
            for kc in range(3):
                k = kr * 3 + kc
                s = PAD + (kr - 1) * W + (kc - 1)
                p = slab_ref[:, s:s + HW]
                if kc == 0:
                    p = p * mask_l
                elif kc == 2:
                    p = p * mask_r
                patch_ref[k * C:(k + 1) * C, :] = p

        # One MXU matmul per conv: (C, 9C) @ (9C, HW) -> (C, HW), f32 acc.
        acc = jnp.dot(w_ref[...], patch_ref[...],
                      preferred_element_type=jnp.float32)

        # InstanceNorm2d (biased variance over the HW lanes) + affine folded
        # into one scale/shift FMA; rsqrt goes to the EUP.  Then LeakyReLU.
        mean = jnp.mean(acc, axis=1, keepdims=True)          # (C, 1)
        xc = acc - mean
        var = jnp.mean(xc * xc, axis=1, keepdims=True)       # (C, 1)
        scale = g_ref[...] * lax.rsqrt(var + EPS)            # (C, 1)
        y = xc * scale + be_ref[...]
        return jnp.where(y >= 0, y, NEG_SLOPE * y)

    x = x_ref[0]                                             # (C, HW)

    # ---- block 1 ------------------------------------------------------------
    slab_ref[:, PAD:PAD + HW] = x                            # aligned full store
    h = conv_in_lrelu(w1_ref, g1_ref, be1_ref)               # (C, HW)

    # ---- block 2: intermediate never leaves VMEM/vregs ----------------------
    slab_ref[:, PAD:PAD + HW] = h
    y = conv_in_lrelu(w2_ref, g2_ref, be2_ref)               # (C, HW)

    # ---- residual add + single unmasked full-width store --------------------
    out_ref[0] = y + x


@jax.jit
def resblock_forward(x_nchw, params):
    """ResBlock forward.  Input/output NCHW; only metadata reshapes outside."""
    B, C, H, W = x_nchw.shape
    HW = H * W
    assert C % 8 == 0 and HW % LANE == 0 and PAD >= W + 1, (C, H, W)
    # TODO(synk): for large H*W*C, strip-tile the (9C, HW) im2col scratch over
    # H (or use bf16 operands) so the working set stays inside v7x's 64 MiB VMEM.

    x = x_nchw.reshape(B, C, HW)                 # metadata-only reshape

    # (C_out, C_in, 3, 3) -> (C_out, 9*C_in), column order (kr*3+kc)*C + ci.
    w1 = params["w1"].transpose(0, 2, 3, 1).reshape(C, 9 * C)
    w2 = params["w2"].transpose(0, 2, 3, 1).reshape(C, 9 * C)
    g1 = params["g1"].reshape(C, 1)
    be1 = params["be1"].reshape(C, 1)
    g2 = params["g2"].reshape(C, 1)
    be2 = params["be2"].reshape(C, 1)
    # NOTE: conv biases are intentionally NOT passed to the kernel.  A
    # per-channel constant added before InstanceNorm is exactly cancelled by
    # the mean subtraction (valid only because the norm follows each conv).

    kernel = functools.partial(_resblock_kernel, H=H, W=W, C=C)
    rep = lambda b: (0, 0)        # replicated operands (weights / norm params)

    flops = 2 * (2 * B * HW * 9 * C * C)                  # two 3x3 convs
    bytes_accessed = 4 * (2 * B * C * HW + 2 * (9 * C * C + 2 * C))

    out = pl.pallas_call(
        kernel,
        out_shape=jax.ShapeDtypeStruct((B, C, HW), jnp.float32),
        grid=(B,),
        in_specs=[
            pl.BlockSpec((1, C, HW), lambda b: (b, 0, 0)),   # x
            pl.BlockSpec((C, 9 * C), rep),                   # w1 (im2col layout)
            pl.BlockSpec((C, 1), rep),                       # gamma1
            pl.BlockSpec((C, 1), rep),                       # beta1
            pl.BlockSpec((C, 9 * C), rep),                   # w2 (im2col layout)
            pl.BlockSpec((C, 1), rep),                       # gamma2
            pl.BlockSpec((C, 1), rep),                       # beta2
        ],
        out_specs=pl.BlockSpec((1, C, HW), lambda b: (b, 0, 0)),
        scratch_shapes=[
            pltpu.VMEM((C, HW + 2 * PAD), jnp.float32),      # zero-guarded slab
            pltpu.VMEM((9 * C, HW), jnp.float32),            # im2col matrix
        ],
        compiler_params=pltpu.CompilerParams(
            dimension_semantics=("parallel",),   # B>=2 feeds both v7x TCs
            vmem_limit_bytes=8 * 1024 * 1024),   # working set << 1 MiB
        cost_estimate=pl.CostEstimate(
            flops=flops,
            transcendentals=2 * B * C,           # one rsqrt per channel per norm
            bytes_accessed=bytes_accessed),
    )(x, w1, g1, be1, w2, g2, be2)

    return out.reshape(B, C, H, W)               # metadata-only reshape


def ref_forward(x_nchw, params):
    """Plain-JAX reference matching the PyTorch forward semantics (with bias)."""
    def conv(x, w, b):
        y = lax.conv_general_dilated(
            x, w, window_strides=(1, 1), padding="SAME",
            dimension_numbers=("NCHW", "OIHW", "NCHW"))
        return y + b.reshape(1, -1, 1, 1)

    def inorm(x, g, be):
        mean = x.mean(axis=(2, 3), keepdims=True)
        var = ((x - mean) ** 2).mean(axis=(2, 3), keepdims=True)
        return ((x - mean) * lax.rsqrt(var + EPS)
                * g.reshape(1, -1, 1, 1) + be.reshape(1, -1, 1, 1))

    def lrelu(x):
        return jnp.where(x >= 0, x, NEG_SLOPE * x)

    h = lrelu(inorm(conv(x_nchw, params["w1"], params["b1"]),
                    params["g1"], params["be1"]))
    h = lrelu(inorm(conv(h, params["w2"], params["b2"]),
                    params["g2"], params["be2"]))
    return h + x_nchw


if __name__ == "__main__":
    B, C, H, W = 2, 16, 16, 16        # c_in = 16 (module default), small spatial
    key = jax.random.PRNGKey(0)
    ks = jax.random.split(key, 8)

    x = jax.random.normal(ks[0], (B, C, H, W), jnp.float32)

    # Deterministic synthetic params (PyTorch layouts).  Conv biases are made
    # NON-zero to demonstrate they are cancelled by InstanceNorm (the kernel
    # drops them); IN affine params made non-trivial.
    fan_in = C * 3 * 3
    bound = (6.0 / fan_in) ** 0.5
    params = dict(
        w1=jax.random.uniform(ks[1], (C, C, 3, 3), jnp.float32, -bound, bound),
        b1=0.05 * jax.random.normal(ks[2], (C,), jnp.float32),
        g1=1.0 + 0.1 * jax.random.normal(ks[3], (C,), jnp.float32),
        be1=0.1 * jax.random.normal(ks[4], (C,), jnp.float32),
        w2=jax.random.uniform(ks[5], (C, C, 3, 3), jnp.float32, -bound, bound),
        b2=0.05 * jax.random.normal(ks[6], (C,), jnp.float32),
        g2=1.0 + 0.1 * jax.random.normal(ks[7], (C,), jnp.float32),
        be2=jnp.zeros((C,), jnp.float32),
    )

    out = jax.block_until_ready(resblock_forward(x, params))
    ref = ref_forward(x, params)

    assert out.shape == (B, C, H, W), out.shape
    err = float(jnp.max(jnp.abs(out - ref)))
    assert jnp.allclose(out, ref, atol=1e-3, rtol=1e-3), err
    print("KERNEL_OK")
</pallas_src>

<mosaic_0001>
module attributes {stable_mosaic.version = 11 : i64} {
  func.func @_resblock_kernel(%arg0: i32, %arg1: memref<1x16x256xf32, #tpu.memory_space<vmem>>, %arg2: memref<16x144xf32, #tpu.memory_space<vmem>>, %arg3: memref<16x1xf32, #tpu.memory_space<vmem>>, %arg4: memref<16x1xf32, #tpu.memory_space<vmem>>, %arg5: memref<16x144xf32, #tpu.memory_space<vmem>>, %arg6: memref<16x1xf32, #tpu.memory_space<vmem>>, %arg7: memref<16x1xf32, #tpu.memory_space<vmem>>, %arg8: memref<1x16x256xf32, #tpu.memory_space<vmem>>, %arg9: memref<16x512xf32, #tpu.memory_space<vmem>>, %arg10: memref<144x256xf32, #tpu.memory_space<vmem>>) attributes {dimension_semantics = [#tpu.dimension_semantics<parallel>], iteration_bounds = array<i64: 2>, scalar_prefetch = 0 : i64, scratch_operands = 2 : i64, tpu.core_type = #tpu.core_type<tc>, window_params = [{transform_indices = @transform_0, window_bounds = array<i64: 1, 16, 256>}, {pipeline_mode = #tpu.pipeline_mode<synchronous>, transform_indices = @transform_1, window_bounds = array<i64: 16, 144>}, {pipeline_mode = #tpu.pipeline_mode<synchronous>, transform_indices = @transform_2, window_bounds = array<i64: 16, 1>}, {pipeline_mode = #tpu.pipeline_mode<synchronous>, transform_indices = @transform_3, window_bounds = array<i64: 16, 1>}, {pipeline_mode = #tpu.pipeline_mode<synchronous>, transform_indices = @transform_4, window_bounds = array<i64: 16, 144>}, {pipeline_mode = #tpu.pipeline_mode<synchronous>, transform_indices = @transform_5, window_bounds = array<i64: 16, 1>}, {pipeline_mode = #tpu.pipeline_mode<synchronous>, transform_indices = @transform_6, window_bounds = array<i64: 16, 1>}, {transform_indices = @transform_7, window_bounds = array<i64: 1, 16, 256>}]} {
    %0 = tpu.iota {dimensions = array<i32: 1>} : vector<1x256xi32>
    %c16_i32 = arith.constant 16 : i32
    %c0_i32 = arith.constant 0 : i32
    %1 = arith.cmpi eq, %c16_i32, %c0_i32 : i32
    %c1_i32 = arith.constant 1 : i32
    %2 = arith.select %1, %c1_i32, %c16_i32 : i32
    %3 = vector.broadcast %2 : i32 to vector<1x256xi32>
    %4 = arith.remsi %0, %3 : vector<1x256xi32>
    %c0_i32_0 = arith.constant 0 : i32
    %5 = vector.broadcast %c0_i32_0 : i32 to vector<1x256xi32>
    %6 = arith.cmpi ne, %4, %5 : vector<1x256xi32>
    %c0_i32_1 = arith.constant 0 : i32
    %7 = vector.broadcast %c0_i32_1 : i32 to vector<1x256xi32>
    %8 = arith.cmpi slt, %4, %7 : vector<1x256xi32>
    %c0_i32_2 = arith.constant 0 : i32
    %9 = arith.cmpi slt, %2, %c0_i32_2 : i32
    %10 = vector.broadcast %9 : i1 to vector<1x256xi1>
    %11 = vector.broadcast %10 : vector<1x256xi1> to vector<1x256xi1>
    %12 = arith.xori %8, %11 : vector<1x256xi1>
    %13 = arith.andi %12, %6 : vector<1x256xi1>
    %14 = vector.broadcast %2 : i32 to vector<1x256xi32>
    %15 = arith.addi %4, %14 : vector<1x256xi32>
    %16 = arith.select %13, %15, %4 : vector<1x256xi1>, vector<1x256xi32>
    %c0_i32_3 = arith.constant 0 : i32
    %17 = vector.broadcast %c0_i32_3 : i32 to vector<1x256xi32>
    %18 = arith.cmpi sgt, %16, %17 : vector<1x256xi32>
    %19 = arith.extui %18 : vector<1x256xi1> to vector<1x256xi32>
    %20 = arith.sitofp %19 : vector<1x256xi32> to vector<1x256xf32>
    %c15_i32 = arith.constant 15 : i32
    %21 = vector.broadcast %c15_i32 : i32 to vector<1x256xi32>
    %22 = arith.cmpi slt, %16, %21 : vector<1x256xi32>
    %23 = arith.extui %22 : vector<1x256xi1> to vector<1x256xi32>
    %24 = arith.sitofp %23 : vector<1x256xi32> to vector<1x256xf32>
    %cst = arith.constant 0.000000e+00 : f32
    %25 = vector.broadcast %cst : f32 to vector<16x128xf32>
    %c0 = arith.constant 0 : index
    %c0_4 = arith.constant 0 : index
    %26 = vector.load %arg9[%c0, %c0_4] : memref<16x512xf32, #tpu.memory_space<vmem>>, vector<16x128xf32>
    tpu.vector_store %arg9[%c0, %c0_4], %25 {strides = array<i32>} : memref<16x512xf32, #tpu.memory_space<vmem>>, vector<16x128xf32>,
    %cst_5 = arith.constant 0.000000e+00 : f32
    %27 = vector.broadcast %cst_5 : f32 to vector<16x128xf32>
    %c0_6 = arith.constant 0 : index
    %c384 = arith.constant 384 : index
    %28 = vector.load %arg9[%c0_6, %c384] : memref<16x512xf32, #tpu.memory_space<vmem>>, vector<16x128xf32>
    tpu.vector_store %arg9[%c0_6, %c384], %27 {strides = array<i32>} : memref<16x512xf32, #tpu.memory_space<vmem>>, vector<16x128xf32>,
    %c0_7 = arith.constant 0 : index
    %c0_8 = arith.constant 0 : index
    %c0_9 = arith.constant 0 : index
    %29 = vector.load %arg1[%c0_7, %c0_8, %c0_9] : memref<1x16x256xf32, #tpu.memory_space<vmem>>, vector<1x16x256xf32>
    %30 = vector.shape_cast %29 : vector<1x16x256xf32> to vector<16x256xf32>
    %c0_10 = arith.constant 0 : index
    %c128 = arith.constant 128 : index
    %31 = vector.load %arg9[%c0_10, %c128] : memref<16x512xf32, #tpu.memory_space<vmem>>, vector<16x256xf32>
    tpu.vector_store %arg9[%c0_10, %c128], %30 {strides = array<i32>} : memref<16x512xf32, #tpu.memory_space<vmem>>, vector<16x256xf32>,
    %c0_11 = arith.constant 0 : index
    %c111 = arith.constant 111 : index
    %32 = vector.load %arg9[%c0_11, %c111] : memref<16x512xf32, #tpu.memory_space<vmem>>, vector<16x256xf32>
    %33 = vector.broadcast %20 : vector<1x256xf32> to vector<16x256xf32>
    %34 = arith.mulf %32, %33 : vector<16x256xf32>
    %c0_12 = arith.constant 0 : index
    %c0_13 = arith.constant 0 : index
    %35 = vector.load %arg10[%c0_12, %c0_13] : memref<144x256xf32, #tpu.memory_space<vmem>>, vector<16x256xf32>
    tpu.vector_store %arg10[%c0_12, %c0_13], %34 {strides = array<i32>} : memref<144x256xf32, #tpu.memory_space<vmem>>, vector<16x256xf32>,
    %c0_14 = arith.constant 0 : index
    %c112 = arith.constant 112 : index
    %36 = vector.load %arg9[%c0_14, %c112] : memref<16x512xf32, #tpu.memory_space<vmem>>, vector<16x256xf32>
    %c16 = arith.constant 16 : index
    %c0_15 = arith.constant 0 : index
    %37 = vector.load %arg10[%c16, %c0_15] : memref<144x256xf32, #tpu.memory_space<vmem>>, vector<16x256xf32>
    tpu.vector_store %arg10[%c16, %c0_15], %36 {strides = array<i32>} : memref<144x256xf32, #tpu.memory_space<vmem>>, vector<16x256xf32>,
    %c0_16 = arith.constant 0 : index
    %c113 = arith.constant 113 : index
    %38 = vector.load %arg9[%c0_16, %c113] : memref<16x512xf32, #tpu.memory_space<vmem>>, vector<16x256xf32>
    %39 = vector.broadcast %24 : vector<1x256xf32> to vector<16x256xf32>
    %40 = arith.mulf %38, %39 : vector<16x256xf32>
    %c32 = arith.constant 32 : index
    %c0_17 = arith.constant 0 : index
    %41 = vector.load %arg10[%c32, %c0_17] : memref<144x256xf32, #tpu.memory_space<vmem>>, vector<16x256xf32>
    tpu.vector_store %arg10[%c32, %c0_17], %40 {strides = array<i32>} : memref<144x256xf32, #tpu.memory_space<vmem>>, vector<16x256xf32>,
    %c0_18 = arith.constant 0 : index
    %c127 = arith.constant 127 : index
    %42 = vector.load %arg9[%c0_18, %c127] : memref<16x512xf32, #tpu.memory_space<vmem>>, vector<16x256xf32>
    %43 = vector.broadcast %20 : vector<1x256xf32> to vector<16x256xf32>
    %44 = arith.mulf %42, %43 : vector<16x256xf32>
    %c48 = arith.constant 48 : index
    %c0_19 = arith.constant 0 : index
    %45 = vector.load %arg10[%c48, %c0_19] : memref<144x256xf32, #tpu.memory_space<vmem>>, vector<16x256xf32>
    tpu.vector_store %arg10[%c48, %c0_19], %44 {strides = array<i32>} : memref<144x256xf32, #tpu.memory_space<vmem>>, vector<16x256xf32>,
    %c0_20 = arith.constant 0 : index
    %c128_21 = arith.constant 128 : index
    %46 = vector.load %arg9[%c0_20, %c128_21] : memref<16x512xf32, #tpu.memory_space<vmem>>, vector<16x256xf32>
    %c64 = arith.constant 64 : index
    %c0_22 = arith.constant 0 : index
    %47 = vector.load %arg10[%c64, %c0_22] : memref<144x256xf32, #tpu.memory_space<vmem>>, vector<16x256xf32>
    tpu.vector_store %arg10[%c64, %c0_22], %46 {strides = array<i32>} : memref<144x256xf32, #tpu.memory_space<vmem>>, vector<16x256xf32>,
    %c0_23 = arith.constant 0 : index
    %c129 = arith.constant 129 : index
    %48 = vector.load %arg9[%c0_23, %c129] : memref<16x512xf32, #tpu.memory_space<vmem>>, vector<16x256xf32>
    %49 = vector.broadcast %24 : vector<1x256xf32> to vector<16x256xf32>
    %50 = arith.mulf %48, %49 : vector<16x256xf32>
    %c80 = arith.constant 80 : index
    %c0_24 = arith.constant 0 : index
    %51 = vector.load %arg10[%c80, %c0_24] : memref<144x256xf32, #tpu.memory_space<vmem>>, vector<16x256xf32>
    tpu.vector_store %arg10[%c80, %c0_24], %50 {strides = array<i32>} : memref<144x256xf32, #tpu.memory_space<vmem>>, vector<16x256xf32>,
    %c0_25 = arith.constant 0 : index
    %c143 = arith.constant 143 : index
    %52 = vector.load %arg9[%c0_25, %c143] : memref<16x512xf32, #tpu.memory_space<vmem>>, vector<16x256xf32>
    %53 = vector.broadcast %20 : vector<1x256xf32> to vector<16x256xf32>
    %54 = arith.mulf %52, %53 : vector<16x256xf32>
    %c96 = arith.constant 96 : index
    %c0_26 = arith.constant 0 : index
    %55 = vector.load %arg10[%c96, %c0_26] : memref<144x256xf32, #tpu.memory_space<vmem>>, vector<16x256xf32>
    tpu.vector_store %arg10[%c96, %c0_26], %54 {strides = array<i32>} : memref<144x256xf32, #tpu.memory_space<vmem>>, vector<16x256xf32>,
    %c0_27 = arith.constant 0 : index
    %c144 = arith.constant 144 : index
    %56 = vector.load %arg9[%c0_27, %c144] : memref<16x512xf32, #tpu.memory_space<vmem>>, vector<16x256xf32>
    %c112_28 = arith.constant 112 : index
    %c0_29 = arith.constant 0 : index
    %57 = vector.load %arg10[%c112_28, %c0_29] : memref<144x256xf32, #tpu.memory_space<vmem>>, vector<16x256xf32>
    tpu.vector_store %arg10[%c112_28, %c0_29], %56 {strides = array<i32>} : memref<144x256xf32, #tpu.memory_space<vmem>>, vector<16x256xf32>,
    %c0_30 = arith.constant 0 : index
    %c145 = arith.constant 145 : index
    %58 = vector.load %arg9[%c0_30, %c145] : memref<16x512xf32, #tpu.memory_space<vmem>>, vector<16x256xf32>
    %59 = vector.broadcast %24 : vector<1x256xf32> to vector<16x256xf32>
    %60 = arith.mulf %58, %59 : vector<16x256xf32>
    %c128_31 = arith.constant 128 : index
    %c0_32 = arith.constant 0 : index
    %61 = vector.load %arg10[%c128_31, %c0_32] : memref<144x256xf32, #tpu.memory_space<vmem>>, vector<16x256xf32>
    tpu.vector_store %arg10[%c128_31, %c0_32], %60 {strides = array<i32>} : memref<144x256xf32, #tpu.memory_space<vmem>>, vector<16x256xf32>,
    %c0_33 = arith.constant 0 : index
    %c0_34 = arith.constant 0 : index
    %62 = vector.load %arg2[%c0_33, %c0_34] : memref<16x144xf32, #tpu.memory_space<vmem>>, vector<16x144xf32>
    %c0_35 = arith.constant 0 : index
    %c0_36 = arith.constant 0 : index
    %63 = vector.load %arg10[%c0_35, %c0_36] : memref<144x256xf32, #tpu.memory_space<vmem>>, vector<144x256xf32>
    %cst_37 = arith.constant dense<0.000000e+00> : vector<16x256xf32>
    %64 = tpu.matmul %62, %63, %cst_37 {dimension_numbers = #tpu.dot_dimension_numbers<[1], [0], [0], [1], [0, 0, 1, 1], [], []>} : vector<16x144xf32>, vector<144x256xf32>, vector<16x256xf32> -> vector<16x256xf32>
    %cst_38 = arith.constant dense<0.000000e+00> : vector<16xf32>
    %65 = vector.multi_reduction <add>, %64, %cst_38 [1] : vector<16x256xf32> to vector<16xf32>
    %66 = vector.shape_cast %65 : vector<16xf32> to vector<16x1xf32>
    %cst_39 = arith.constant 2.560000e+02 : f32
    %67 = vector.broadcast %cst_39 : f32 to vector<16x1xf32>
    %68 = arith.divf %66, %67 : vector<16x1xf32>
    %69 = vector.broadcast %68 : vector<16x1xf32> to vector<16x256xf32>
    %70 = arith.subf %64, %69 : vector<16x256xf32>
    %71 = arith.mulf %70, %70 : vector<16x256xf32>
    %cst_40 = arith.constant dense<0.000000e+00> : vector<16xf32>
    %72 = vector.multi_reduction <add>, %71, %cst_40 [1] : vector<16x256xf32> to vector<16xf32>
    %73 = vector.shape_cast %72 : vector<16xf32> to vector<16x1xf32>
    %cst_41 = arith.constant 2.560000e+02 : f32
    %74 = vector.broadcast %cst_41 : f32 to vector<16x1xf32>
    %75 = arith.divf %73, %74 : vector<16x1xf32>
    %c0_42 = arith.constant 0 : index
    %c0_43 = arith.constant 0 : index
    %76 = vector.load %arg3[%c0_42, %c0_43] : memref<16x1xf32, #tpu.memory_space<vmem>>, vector<16x1xf32>
    %cst_44 = arith.constant 9.99999974E-6 : f32
    %77 = vector.broadcast %cst_44 : f32 to vector<16x1xf32>
    %78 = arith.addf %75, %77 : vector<16x1xf32>
    %79 = math.rsqrt %78 : vector<16x1xf32>
    %80 = arith.mulf %76, %79 : vector<16x1xf32>
    %81 = vector.broadcast %80 : vector<16x1xf32> to vector<16x256xf32>
    %82 = arith.mulf %70, %81 : vector<16x256xf32>
    %c0_45 = arith.constant 0 : index
    %c0_46 = arith.constant 0 : index
    %83 = vector.load %arg4[%c0_45, %c0_46] : memref<16x1xf32, #tpu.memory_space<vmem>>, vector<16x1xf32>
    %84 = vector.broadcast %83 : vector<16x1xf32> to vector<16x256xf32>
    %85 = arith.addf %82, %84 : vector<16x256xf32>
    %cst_47 = arith.constant 0.000000e+00 : f32
    %86 = vector.broadcast %cst_47 : f32 to vector<16x256xf32>
    %87 = arith.cmpf oge, %85, %86 : vector<16x256xf32>
    %cst_48 = arith.constant 0.00999999977 : f32
    %88 = vector.broadcast %cst_48 : f32 to vector<16x256xf32>
    %89 = arith.mulf %88, %85 : vector<16x256xf32>
    %90 = arith.select %87, %85, %89 : vector<16x256xi1>, vector<16x256xf32>
    %c0_49 = arith.constant 0 : index
    %c128_50 = arith.constant 128 : index
    %91 = vector.load %arg9[%c0_49, %c128_50] : memref<16x512xf32, #tpu.memory_space<vmem>>, vector<16x256xf32>
    tpu.vector_store %arg9[%c0_49, %c128_50], %90 {strides = array<i32>} : memref<16x512xf32, #tpu.memory_space<vmem>>, vector<16x256xf32>,
    %c0_51 = arith.constant 0 : index
    %c111_52 = arith.constant 111 : index
    %92 = vector.load %arg9[%c0_51, %c111_52] : memref<16x512xf32, #tpu.memory_space<vmem>>, vector<16x256xf32>
    %93 = vector.broadcast %20 : vector<1x256xf32> to vector<16x256xf32>
    %94 = arith.mulf %92, %93 : vector<16x256xf32>
    %c0_53 = arith.constant 0 : index
    %c0_54 = arith.constant 0 : index
    %95 = vector.load %arg10[%c0_53, %c0_54] : memref<144x256xf32, #tpu.memory_space<vmem>>, vector<16x256xf32>
    tpu.vector_store %arg10[%c0_53, %c0_54], %94 {strides = array<i32>} : memref<144x256xf32, #tpu.memory_space<vmem>>, vector<16x256xf32>,
    %c0_55 = arith.constant 0 : index
    %c112_56 = arith.constant 112 : index
    %96 = vector.load %arg9[%c0_55, %c112_56] : memref<16x512xf32, #tpu.memory_space<vmem>>, vector<16x256xf32>
    %c16_57 = arith.constant 16 : index
    %c0_58 = arith.constant 0 : index
    %97 = vector.load %arg10[%c16_57, %c0_58] : memref<144x256xf32, #tpu.memory_space<vmem>>, vector<16x256xf32>
    tpu.vector_store %arg10[%c16_57, %c0_58], %96 {strides = array<i32>} : memref<144x256xf32, #tpu.memory_space<vmem>>, vector<16x256xf32>,
    %c0_59 = arith.constant 0 : index
    %c113_60 = arith.constant 113 : index
    %98 = vector.load %arg9[%c0_59, %c113_60] : memref<16x512xf32, #tpu.memory_space<vmem>>, vector<16x256xf32>
    %99 = vector.broadcast %24 : vector<1x256xf32> to vector<16x256xf32>
    %100 = arith.mulf %98, %99 : vector<16x256xf32>
    %c32_61 = arith.constant 32 : index
    %c0_62 = arith.constant 0 : index
    %101 = vector.load %arg10[%c32_61, %c0_62] : memref<144x256xf32, #tpu.memory_space<vmem>>, vector<16x256xf32>
    tpu.vector_store %arg10[%c32_61, %c0_62], %100 {strides = array<i32>} : memref<144x256xf32, #tpu.memory_space<vmem>>, vector<16x256xf32>,
    %c0_63 = arith.constant 0 : index
    %c127_64 = arith.constant 127 : index
    %102 = vector.load %arg9[%c0_63, %c127_64] : memref<16x512xf32, #tpu.memory_space<vmem>>, vector<16x256xf32>
    %103 = vector.broadcast %20 : vector<1x256xf32> to vector<16x256xf32>
    %104 = arith.mulf %102, %103 : vector<16x256xf32>
    %c48_65 = arith.constant 48 : index
    %c0_66 = arith.constant 0 : index
    %105 = vector.load %arg10[%c48_65, %c0_66] : memref<144x256xf32, #tpu.memory_space<vmem>>, vector<16x256xf32>
    tpu.vector_store %arg10[%c48_65, %c0_66], %104 {strides = array<i32>} : memref<144x256xf32, #tpu.memory_space<vmem>>, vector<16x256xf32>,
    %c0_67 = arith.constant 0 : index
    %c128_68 = arith.constant 128 : index
    %106 = vector.load %arg9[%c0_67, %c128_68] : memref<16x512xf32, #tpu.memory_space<vmem>>, vector<16x256xf32>
    %c64_69 = arith.constant 64 : index
    %c0_70 = arith.constant 0 : index
    %107 = vector.load %arg10[%c64_69, %c0_70] : memref<144x256xf32, #tpu.memory_space<vmem>>, vector<16x256xf32>
    tpu.vector_store %arg10[%c64_69, %c0_70], %106 {strides = array<i32>} : memref<144x256xf32, #tpu.memory_space<vmem>>, vector<16x256xf32>,
    %c0_71 = arith.constant 0 : index
    %c129_72 = arith.constant 129 : index
    %108 = vector.load %arg9[%c0_71, %c129_72] : memref<16x512xf32, #tpu.memory_space<vmem>>, vector<16x256xf32>
    %109 = vector.broadcast %24 : vector<1x256xf32> to vector<16x256xf32>
    %110 = arith.mulf %108, %109 : vector<16x256xf32>
    %c80_73 = arith.constant 80 : index
    %c0_74 = arith.constant 0 : index
    %111 = vector.load %arg10[%c80_73, %c0_74] : memref<144x256xf32, #tpu.memory_space<vmem>>, vector<16x256xf32>
    tpu.vector_store %arg10[%c80_73, %c0_74], %110 {strides = array<i32>} : memref<144x256xf32, #tpu.memory_space<vmem>>, vector<16x256xf32>,
    %c0_75 = arith.constant 0 : index
    %c143_76 = arith.constant 143 : index
    %112 = vector.load %arg9[%c0_75, %c143_76] : memref<16x512xf32, #tpu.memory_space<vmem>>, vector<16x256xf32>
    %113 = vector.broadcast %20 : vector<1x256xf32> to vector<16x256xf32>
    %114 = arith.mulf %112, %113 : vector<16x256xf32>
    %c96_77 = arith.constant 96 : index
    %c0_78 = arith.constant 0 : index
    %115 = vector.load %arg10[%c96_77, %c0_78] : memref<144x256xf32, #tpu.memory_space<vmem>>, vector<16x256xf32>
    tpu.vector_store %arg10[%c96_77, %c0_78], %114 {strides = array<i32>} : memref<144x256xf32, #tpu.memory_space<vmem>>, vector<16x256xf32>,
    %c0_79 = arith.constant 0 : index
    %c144_80 = arith.constant 144 : index
    %116 = vector.load %arg9[%c0_79, %c144_80] : memref<16x512xf32, #tpu.memory_space<vmem>>, vector<16x256xf32>
    %c112_81 = arith.constant 112 : index
    %c0_82 = arith.constant 0 : index
    %117 = vector.load %arg10[%c112_81, %c0_82] : memref<144x256xf32, #tpu.memory_space<vmem>>, vector<16x256xf32>
    tpu.vector_store %arg10[%c112_81, %c0_82], %116 {strides = array<i32>} : memref<144x256xf32, #tpu.memory_space<vmem>>, vector<16x256xf32>,
    %c0_83 = arith.constant 0 : index
    %c145_84 = arith.constant 145 : index
    %118 = vector.load %arg9[%c0_83, %c145_84] : memref<16x512xf32, #tpu.memory_space<vmem>>, vector<16x256xf32>
    %119 = vector.broadcast %24 : vector<1x256xf32> to vector<16x256xf32>
    %120 = arith.mulf %118, %119 : vector<16x256xf32>
    %c128_85 = arith.constant 128 : index
    %c0_86 = arith.constant 0 : index
    %121 = vector.load %arg10[%c128_85, %c0_86] : memref<144x256xf32, #tpu.memory_space<vmem>>, vector<16x256xf32>
    tpu.vector_store %arg10[%c128_85, %c0_86], %120 {strides = array<i32>} : memref<144x256xf32, #tpu.memory_space<vmem>>, vector<16x256xf32>,
    %c0_87 = arith.constant 0 : index
    %c0_88 = arith.constant 0 : index
    %122 = vector.load %arg5[%c0_87, %c0_88] : memref<16x144xf32, #tpu.memory_space<vmem>>, vector<16x144xf32>
    %c0_89 = arith.constant 0 : index
    %c0_90 = arith.constant 0 : index
    %123 = vector.load %arg10[%c0_89, %c0_90] : memref<144x256xf32, #tpu.memory_space<vmem>>, vector<144x256xf32>
    %cst_91 = arith.constant dense<0.000000e+00> : vector<16x256xf32>
    %124 = tpu.matmul %122, %123, %cst_91 {dimension_numbers = #tpu.dot_dimension_numbers<[1], [0], [0], [1], [0, 0, 1, 1], [], []>} : vector<16x144xf32>, vector<144x256xf32>, vector<16x256xf32> -> vector<16x256xf32>
    %cst_92 = arith.constant dense<0.000000e+00> : vector<16xf32>
    %125 = vector.multi_reduction <add>, %124, %cst_92 [1] : vector<16x256xf32> to vector<16xf32>
    %126 = vector.shape_cast %125 : vector<16xf32> to vector<16x1xf32>
    %cst_93 = arith.constant 2.560000e+02 : f32
    %127 = vector.broadcast %cst_93 : f32 to vector<16x1xf32>
    %128 = arith.divf %126, %127 : vector<16x1xf32>
    %129 = vector.broadcast %128 : vector<16x1xf32> to vector<16x256xf32>
    %130 = arith.subf %124, %129 : vector<16x256xf32>
    %131 = arith.mulf %130, %130 : vector<16x256xf32>
    %cst_94 = arith.constant dense<0.000000e+00> : vector<16xf32>
    %132 = vector.multi_reduction <add>, %131, %cst_94 [1] : vector<16x256xf32> to vector<16xf32>
    %133 = vector.shape_cast %132 : vector<16xf32> to vector<16x1xf32>
    %cst_95 = arith.constant 2.560000e+02 : f32
    %134 = vector.broadcast %cst_95 : f32 to vector<16x1xf32>
    %135 = arith.divf %133, %134 : vector<16x1xf32>
    %c0_96 = arith.constant 0 : index
    %c0_97 = arith.constant 0 : index
    %136 = vector.load %arg6[%c0_96, %c0_97] : memref<16x1xf32, #tpu.memory_space<vmem>>, vector<16x1xf32>
    %cst_98 = arith.constant 9.99999974E-6 : f32
    %137 = vector.broadcast %cst_98 : f32 to vector<16x1xf32>
    %138 = arith.addf %135, %137 : vector<16x1xf32>
    %139 = math.rsqrt %138 : vector<16x1xf32>
    %140 = arith.mulf %136, %139 : vector<16x1xf32>
    %141 = vector.broadcast %140 : vector<16x1xf32> to vector<16x256xf32>
    %142 = arith.mulf %130, %141 : vector<16x256xf32>
    %c0_99 = arith.constant 0 : index
    %c0_100 = arith.constant 0 : index
    %143 = vector.load %arg7[%c0_99, %c0_100] : memref<16x1xf32, #tpu.memory_space<vmem>>, vector<16x1xf32>
    %144 = vector.broadcast %143 : vector<16x1xf32> to vector<16x256xf32>
    %145 = arith.addf %142, %144 : vector<16x256xf32>
    %cst_101 = arith.constant 0.000000e+00 : f32
    %146 = vector.broadcast %cst_101 : f32 to vector<16x256xf32>
    %147 = arith.cmpf oge, %145, %146 : vector<16x256xf32>
    %cst_102 = arith.constant 0.00999999977 : f32
    %148 = vector.broadcast %cst_102 : f32 to vector<16x256xf32>
    %149 = arith.mulf %148, %145 : vector<16x256xf32>
    %150 = arith.select %147, %145, %149 : vector<16x256xi1>, vector<16x256xf32>
    %151 = arith.addf %150, %30 : vector<16x256xf32>
    %c0_103 = arith.constant 0 : index
    %c0_104 = arith.constant 0 : index
    %c0_105 = arith.constant 0 : index
    %152 = vector.load %arg8[%c0_103, %c0_104, %c0_105] : memref<1x16x256xf32, #tpu.memory_space<vmem>>, vector<1x16x256xf32>
    %153 = vector.shape_cast %152 : vector<1x16x256xf32> to vector<16x256xf32>
    %154 = vector.shape_cast %151 : vector<16x256xf32> to vector<1x16x256xf32>
    tpu.vector_store %arg8[%c0_103, %c0_104, %c0_105], %154 {strides = array<i32>} : memref<1x16x256xf32, #tpu.memory_space<vmem>>, vector<1x16x256xf32>,
    return
  }
  func.func @transform_0(%arg0: i32) -> (i32, i32, i32) {
    %c0_i32 = arith.constant 0 : i32
    %c0_i32_0 = arith.constant 0 : i32
    %c0_i32_1 = arith.constant 0 : i32
    return %arg0, %c0_i32, %c0_i32_0 : i32, i32, i32
  }
  func.func @transform_1(%arg0: i32) -> (i32, i32) {
    %c0_i32 = arith.constant 0 : i32
    %c0_i32_0 = arith.constant 0 : i32
    %c0_i32_1 = arith.constant 0 : i32
    return %c0_i32, %c0_i32_0 : i32, i32
  }
  func.func @transform_2(%arg0: i32) -> (i32, i32) {
    %c0_i32 = arith.constant 0 : i32
    %c0_i32_0 = arith.constant 0 : i32
    %c0_i32_1 = arith.constant 0 : i32
    return %c0_i32, %c0_i32_0 : i32, i32
  }
  func.func @transform_3(%arg0: i32) -> (i32, i32) {
    %c0_i32 = arith.constant 0 : i32
    %c0_i32_0 = arith.constant 0 : i32
    %c0_i32_1 = arith.constant 0 : i32
    return %c0_i32, %c0_i32_0 : i32, i32
  }
  func.func @transform_4(%arg0: i32) -> (i32, i32) {
    %c0_i32 = arith.constant 0 : i32
    %c0_i32_0 = arith.constant 0 : i32
    %c0_i32_1 = arith.constant 0 : i32
    return %c0_i32, %c0_i32_0 : i32, i32
  }
  func.func @transform_5(%arg0: i32) -> (i32, i32) {
    %c0_i32 = arith.constant 0 : i32
    %c0_i32_0 = arith.constant 0 : i32
    %c0_i32_1 = arith.constant 0 : i32
    return %c0_i32, %c0_i32_0 : i32, i32
  }
  func.func @transform_6(%arg0: i32) -> (i32, i32) {
    %c0_i32 = arith.constant 0 : i32
    %c0_i32_0 = arith.constant 0 : i32
    %c0_i32_1 = arith.constant 0 : i32
    return %c0_i32, %c0_i32_0 : i32, i32
  }
  func.func @transform_7(%arg0: i32) -> (i32, i32, i32) {
    %c0_i32 = arith.constant 0 : i32
    %c0_i32_0 = arith.constant 0 : i32
    %c0_i32_1 = arith.constant 0 : i32
    return %arg0, %c0_i32, %c0_i32_0 : i32, i32, i32
  }
}

</mosaic_0001>

<llo_original>
// kernel: resblock_forward.1
$region0: #{resblock_forward.1}
  #allocation0 [shape = 'u32[]', space=smem, size = 0x4, offset = 0x4, fixed_abs, tag = 'smem constant byte address 0x4 - core index']
  #allocation1 [shape = 'u32[144,128]{1,0:T(1,128)}', space=vmem, size = 0x12000, scoped, tag = 'internal scratch']
  #allocation2 [shape = 'f32[16,512]{1,0:T(8,128)}', space=vmem, size = 0x8000, scoped, tag = 'scratch operand']
  #allocation3 [shape = 'f32[144,256]{1,0:T(8,128)}', space=vmem, size = 0x24000, scoped, tag = 'scratch operand']
  %s0 = inlined_call_operand.vmem [shape: f32[2,16,256], index: 0, kind: input, shape index: {}]
  %s1 = inlined_call_operand.vmem [shape: f32[16,144], index: 1, kind: input, shape index: {}]
  %s2 = inlined_call_operand.vmem [shape: f32[16,1], index: 2, kind: input, shape index: {}]
  %s3 = inlined_call_operand.vmem [shape: f32[16,1], index: 3, kind: input, shape index: {}]
  %s4 = inlined_call_operand.vmem [shape: f32[16,144], index: 4, kind: input, shape index: {}]
  %s5 = inlined_call_operand.vmem [shape: f32[16,1], index: 5, kind: input, shape index: {}]
  %s6 = inlined_call_operand.vmem [shape: f32[16,1], index: 6, kind: input, shape index: {}]
  %s7 = inlined_call_operand.vmem [shape: f32[2,16,256], index: 7, kind: output, shape index: {}]
  %s8 = sld [smem:[#allocation0]]
  $region61: #{resblock_forward.1} parent=0
    _
  %s10 = ssub.s32 1, %s8
  %s11 = scalar_select 0, %s10, %s8
  loop: start=0, step=1, limit=4
  $region2: #{resblock_forward.1} parent=0 // loop_pre_header
    _
  $region3: #{resblock_forward.1} parent=0 // loop_header
    %s13 = sphi 0, %s17
    %p14 = scmp.ge.s32.totalorder %s13, 4
    %s23 = sphi 0, %s25
    %s26 = sphi 0, %s23
    %s27 = sphi 0, %s26
    %s43 = sphi 0, %s27
    %s47 = sphi 0, %s47
    %s49 = sphi 0, %s47
    %s50 = sphi 0, %s49
    %s64 = sphi 0, %s50
    %s68 = sphi 0, %s68
    %s70 = sphi 0, %s68
    %s71 = sphi 0, %s70
    %s85 = sphi 0, %s71
    %s89 = sphi 0, %s89
    %s91 = sphi 0, %s89
    %s92 = sphi 0, %s91
    %s106 = sphi 0, %s92
    %s110 = sphi 0, %s110
    %s112 = sphi 0, %s110
    %s113 = sphi 0, %s112
    %s127 = sphi 0, %s113
    %s131 = sphi 0, %s131
    %s133 = sphi 0, %s131
    %s134 = sphi 0, %s133
    %s148 = sphi 0, %s134
    %s152 = sphi 0, %s152
    %s154 = sphi 0, %s152
    %s155 = sphi 0, %s154
    %s169 = sphi 0, %s155
    %s175 = sphi 0, %s177
    %s178 = sphi 0, %s175
    %s179 = sphi 0, %s178
    %s195 = sphi 0, %s179
  $region4: #{resblock_forward.1} parent=0 // loop_header_branch
    %16 = sbr.rel (%p14) target = $region8
  $region5: #{resblock_forward.1} parent=0 // loop_body
    %s18 = ssub.s32 %s13, 1
    %s19 = ssub.s32 %s13, 2
    %s20 = sadd.s32 %s13, 1
    %s21 = ssub.s32 %s13, %s20
    %p22 = scmp.eq.s32.totalorder %s21, 0
    %s24 = sadd.s32 %s23, 1
    %s25 = scalar_select %p22, %s23, %s24
    %p28 = pneg %p22
    %p29 = scmp.eq.s32.totalorder %s13, 1
    %p30 = por %p28, %p29
    %p31 = scmp.ne.s32.totalorder %s23, %s26
    %p32 = scmp.eq.s32.totalorder %s13, 0
    %p33 = por %p31, %p32
    %p34 = scmp.ne.s32.totalorder %s23, %s26
    %p35 = scmp.eq.s32.totalorder %s18, 1
    %p36 = por %p34, %p35
    %p37 = scmp.ne.s32.totalorder %s26, %s27
    %p38 = scmp.eq.s32.totalorder %s18, 0
    %p39 = por %p37, %p38
    %p40 = scmp.ne.s32.totalorder %s26, %s27
    %p41 = scmp.eq.s32.totalorder %s19, 1
    %p42 = por %p40, %p41
    %p44 = scmp.ne.s32.totalorder %s27, %s43
    %p45 = scmp.eq.s32.totalorder %s19, 0
    %p46 = por %p44, %p45
    %s48 = sadd.s32 %s47, 1
    %p51 = scmp.eq.s32.totalorder %s13, 1
    %p52 = scmp.ne.s32.totalorder %s47, %s49
    %p53 = scmp.eq.s32.totalorder %s13, 0
    %p54 = por %p52, %p53
    %p55 = scmp.ne.s32.totalorder %s47, %s49
    %p56 = scmp.eq.s32.totalorder %s18, 1
    %p57 = por %p55, %p56
    %p58 = scmp.ne.s32.totalorder %s49, %s50
    %p59 = scmp.eq.s32.totalorder %s18, 0
    %p60 = por %p58, %p59
    %p61 = scmp.ne.s32.totalorder %s49, %s50
    %p62 = scmp.eq.s32.totalorder %s19, 1
    %p63 = por %p61, %p62
    %p65 = scmp.ne.s32.totalorder %s50, %s64
    %p66 = scmp.eq.s32.totalorder %s19, 0
    %p67 = por %p65, %p66
    %s69 = sadd.s32 %s68, 1
    %p72 = scmp.eq.s32.totalorder %s13, 1
    %p73 = scmp.ne.s32.totalorder %s68, %s70
    %p74 = scmp.eq.s32.totalorder %s13, 0
    %p75 = por %p73, %p74
    %p76 = scmp.ne.s32.totalorder %s68, %s70
    %p77 = scmp.eq.s32.totalorder %s18, 1
    %p78 = por %p76, %p77
    %p79 = scmp.ne.s32.totalorder %s70, %s71
    %p80 = scmp.eq.s32.totalorder %s18, 0
    %p81 = por %p79, %p80
    %p82 = scmp.ne.s32.totalorder %s70, %s71
    %p83 = scmp.eq.s32.totalorder %s19, 1
    %p84 = por %p82, %p83
    %p86 = scmp.ne.s32.totalorder %s71, %s85
    %p87 = scmp.eq.s32.totalorder %s19, 0
    %p88 = por %p86, %p87
    %s90 = sadd.s32 %s89, 1
    %p93 = scmp.eq.s32.totalorder %s13, 1
    %p94 = scmp.ne.s32.totalorder %s89, %s91
    %p95 = scmp.eq.s32.totalorder %s13, 0
    %p96 = por %p94, %p95
    %p97 = scmp.ne.s32.totalorder %s89, %s91
    %p98 = scmp.eq.s32.totalorder %s18, 1
    %p99 = por %p97, %p98
    %p100 = scmp.ne.s32.totalorder %s91, %s92
    %p101 = scmp.eq.s32.totalorder %s18, 0
    %p102 = por %p100, %p101
    %p103 = scmp.ne.s32.totalorder %s91, %s92
    %p104 = scmp.eq.s32.totalorder %s19, 1
    %p105 = por %p103, %p104
    %p107 = scmp.ne.s32.totalorder %s92, %s106
    %p108 = scmp.eq.s32.totalorder %s19, 0
    %p109 = por %p107, %p108
    %s111 = sadd.s32 %s110, 1
    %p114 = scmp.eq.s32.totalorder %s13, 1
    %p115 = scmp.ne.s32.totalorder %s110, %s112
    %p116 = scmp.eq.s32.totalorder %s13, 0
    %p117 = por %p115, %p116
    %p118 = scmp.ne.s32.totalorder %s110, %s112
    %p119 = scmp.eq.s32.totalorder %s18, 1
    %p120 = por %p118, %p119
    %p121 = scmp.ne.s32.totalorder %s112, %s113
    %p122 = scmp.eq.s32.totalorder %s18, 0
    %p123 = por %p121, %p122
    %p124 = scmp.ne.s32.totalorder %s112, %s113
    %p125 = scmp.eq.s32.totalorder %s19, 1
    %p126 = por %p124, %p125
    %p128 = scmp.ne.s32.totalorder %s113, %s127
    %p129 = scmp.eq.s32.totalorder %s19, 0
    %p130 = por %p128, %p129
    %s132 = sadd.s32 %s131, 1
    %p135 = scmp.eq.s32.totalorder %s13, 1
    %p136 = scmp.ne.s32.totalorder %s131, %s133
    %p137 = scmp.eq.s32.totalorder %s13, 0
    %p138 = por %p136, %p137
    %p139 = scmp.ne.s32.totalorder %s131, %s133
    %p140 = scmp.eq.s32.totalorder %s18, 1
    %p141 = por %p139, %p140
    %p142 = scmp.ne.s32.totalorder %s133, %s134
    %p143 = scmp.eq.s32.totalorder %s18, 0
    %p144 = por %p142, %p143
    %p145 = scmp.ne.s32.totalorder %s133, %s134
    %p146 = scmp.eq.s32.totalorder %s19, 1
    %p147 = por %p145, %p146
    %p149 = scmp.ne.s32.totalorder %s134, %s148
    %p150 = scmp.eq.s32.totalorder %s19, 0
    %p151 = por %p149, %p150
    %s153 = sadd.s32 %s152, 1
    %p156 = scmp.eq.s32.totalorder %s13, 1
    %p157 = scmp.ne.s32.totalorder %s152, %s154
    %p158 = scmp.eq.s32.totalorder %s13, 0
    %p159 = por %p157, %p158
    %p160 = scmp.ne.s32.totalorder %s152, %s154
    %p161 = scmp.eq.s32.totalorder %s18, 1
    %p162 = por %p160, %p161
    %p163 = scmp.ne.s32.totalorder %s154, %s155
    %p164 = scmp.eq.s32.totalorder %s18, 0
    %p165 = por %p163, %p164
    %p166 = scmp.ne.s32.totalorder %s154, %s155
    %p167 = scmp.eq.s32.totalorder %s19, 1
    %p168 = por %p166, %p167
    %p170 = scmp.ne.s32.totalorder %s155, %s169
    %p171 = scmp.eq.s32.totalorder %s19, 0
    %p172 = por %p170, %p171
    %s173 = ssub.s32 %s13, %s20
    %p174 = scmp.eq.s32.totalorder %s173, 0
    %s176 = sadd.s32 %s175, 1
    %s177 = scalar_select %p174, %s175, %s176
    %p180 = pneg %p174
    %p181 = scmp.eq.s32.totalorder %s13, 1
    %p182 = por %p180, %p181
    %p183 = scmp.ne.s32.totalorder %s175, %s178
    %p184 = scmp.eq.s32.totalorder %s13, 0
    %p185 = por %p183, %p184
    %p186 = scmp.ne.s32.totalorder %s175, %s178
    %p187 = scmp.eq.s32.totalorder %s18, 1
    %p188 = por %p186, %p187
    %p189 = scmp.ne.s32.totalorder %s178, %s179
    %p190 = scmp.eq.s32.totalorder %s18, 0
    %p191 = por %p189, %p190
    %p192 = scmp.ne.s32.totalorder %s178, %s179
    %p193 = scmp.eq.s32.totalorder %s19, 1
    %p194 = por %p192, %p193
    %p196 = scmp.ne.s32.totalorder %s179, %s195
    %p197 = scmp.eq.s32.totalorder %s19, 0
    %p198 = por %p196, %p197
    %p199 = scmp.le.s32.totalorder 1, %s13
    %p200 = scmp.lt.s32.totalorder %s13, 3
    %p201 = pnand %p199, %p200
    %p202 = pneg %p201
    // Predicated region
    $region9: #{resblock_forward.1} parent=5 // pred_check
      _
    $region10: #{resblock_forward.1} parent=5 // pred_check_branch
      %204 = sbr.rel (%p201) target = $region12
    $region11: #{resblock_forward.1} parent=5 // pred_region
      %s205 = ssub.s32 %s13, 1
      // Predicated region
      $region13: #{resblock_forward.1} parent=11 // pred_check
        %p206 = pneg %p60
      $region14: #{resblock_forward.1} parent=11 // pred_check_branch
        %208 = sbr.rel (%p206) target = $region16
      $region15: #{resblock_forward.1} parent=11 // pred_region
        _
      $region16: #{resblock_forward.1} parent=11 // pred_fallthru
        _
      // Predicated region
      $region17: #{resblock_forward.1} parent=11 // pred_check
        %p209 = pneg %p81
      $region18: #{resblock_forward.1} parent=11 // pred_check_branch
        %211 = sbr.rel (%p209) target = $region20
      $region19: #{resblock_forward.1} parent=11 // pred_region
        _
      $region20: #{resblock_forward.1} parent=11 // pred_fallthru
        _
      // Predicated region
      $region21: #{resblock_forward.1} parent=11 // pred_check
        %p212 = pneg %p102
      $region22: #{resblock_forward.1} parent=11 // pred_check_branch
        %214 = sbr.rel (%p212) target = $region24
      $region23: #{resblock_forward.1} parent=11 // pred_region
        _
      $region24: #{resblock_forward.1} parent=11 // pred_fallthru
        _
      // Predicated region
      $region25: #{resblock_forward.1} parent=11 // pred_check
        %p215 = pneg %p123
      $region26: #{resblock_forward.1} parent=11 // pred_check_branch
        %217 = sbr.rel (%p215) target = $region28
      $region27: #{resblock_forward.1} parent=11 // pred_region
        _
      $region28: #{resblock_forward.1} parent=11 // pred_fallthru
        _
      // Predicated region
      $region29: #{resblock_forward.1} parent=11 // pred_check
        %p218 = pneg %p144
      $region30: #{resblock_forward.1} parent=11 // pred_check_branch
        %220 = sbr.rel (%p218) target = $region32
      $region31: #{resblock_forward.1} parent=11 // pred_region
        _
      $region32: #{resblock_forward.1} parent=11 // pred_fallthru
        _
      // Predicated region
      $region33: #{resblock_forward.1} parent=11 // pred_check
        %p221 = pneg %p165
      $region34: #{resblock_forward.1} parent=11 // pred_check_branch
        %223 = sbr.rel (%p221) target = $region36
      $region35: #{resblock_forward.1} parent=11 // pred_region
        _
      $region36: #{resblock_forward.1} parent=11 // pred_fallthru
        _
    $region12: #{resblock_forward.1} parent=5 // pred_fallthru
      _
    %p224 = scmp.lt.s32.totalorder %s13, 2
    // Predicated region
    $region37: #{resblock_forward.1} parent=5 // pred_check
      %p225 = pneg %p224
    $region38: #{resblock_forward.1} parent=5 // pred_check_branch
      %227 = sbr.rel (%p225) target = $region40
    $region39: #{resblock_forward.1} parent=5 // pred_region
      // Predicated region
      $region41: #{resblock_forward.1} parent=39 // pred_check
        %p228 = pneg %p33
      $region42: #{resblock_forward.1} parent=39 // pred_check_branch
        %230 = sbr.rel (%p228) target = $region44
      $region43: #{resblock_forward.1} parent=39 // pred_region
        %p231 = scmp.lt.s32.totalorder %s13, 1
        %s232 = scalar_select %p231, %s13, 1
        %s233 = smul.addr %s232, 4
        %s234 = smul.addr %s233, 8
        %s235 = scalar_lea.vmem %s0, %s234
      $region44: #{resblock_forward.1} parent=39 // pred_fallthru
        _
    $region40: #{resblock_forward.1} parent=5 // pred_fallthru
      _
    %p236 = scmp.le.s32.totalorder 1, %s13
    %p237 = scmp.lt.s32.totalorder %s13, 3
    %p238 = pnand %p236, %p237
    %p239 = pneg %p238
    // Predicated region
    $region45: #{resblock_forward.1} parent=5 // pred_check
      _
    $region46: #{resblock_forward.1} parent=5 // pred_check_branch
      %241 = sbr.rel (%p238) target = $region48
    $region47: #{resblock_forward.1} parent=5 // pred_region
      %s242 = ssub.s32 %s13, 1
      %p243 = scmp.lt.s32.totalorder %s18, 1
      %s244 = scalar_select %p243, %s18, 1
      %s245 = smul.addr %s244, 4
      %s246 = smul.addr %s245, 8
      %s247 = scalar_lea.vmem %s0, %s246
      %p248 = pneg %p39
      %p249 = pneg %p36
      %p250 = pneg %p60
      %p251 = pneg %p57
      %p252 = pneg %p81
      %p253 = pneg %p78
      %p254 = pneg %p102
      %p255 = pneg %p99
      %p256 = pneg %p123
      %p257 = pneg %p120
      %p258 = pneg %p144
      %p259 = pneg %p141
      %p260 = pneg %p165
      %p261 = pneg %p162
      %p262 = pneg %p191
      %p263 = pneg %p188
      %p264 = scmp.lt.s32.totalorder %s18, 1
      %s265 = scalar_select %p264, %s18, 1
      %s266 = smul.addr %s265, 4
      %s267 = smul.addr %s266, 8
      %s268 = scalar_lea.vmem %s7, %s267
      %p269 = scmp.lt.s32.totalorder %s18, 1
      %s270 = scalar_select %p269, %s18, 1
      %s271 = smul.addr %s270, 4
      %s272 = smul.addr %s271, 8
      %s273 = scalar_lea.vmem %s0, %s272
      %p274 = scmp.lt.s32.totalorder %s18, 1
      %s275 = scalar_select %p274, %s18, 1
      %s276 = smul.addr %s275, 4
      %s277 = smul.addr %s276, 8
      %s278 = scalar_lea.vmem %s7, %s277
      %v279 = vlaneseq
      %v280 = vand.u32 %v279, 127
      %v281 = vadd.s32 %v280, 128
      %vm282 = vcmp.lt.s32.totalorder %v280, 0
      %v283 = vsub.s32 0, %v280
      %v284 = vsel %vm282, %v283, %v280
      %v285 = vshrl.u32 %v284, 4
      %v286 = vand.u32 %v284, 15
      %v287 = vsub.s32 0, %v286
      %v288 = vsel %vm282, %v287, %v286
      %vm289 = vcmp.lt.s32.totalorder %v281, 0
      %v290 = vsub.s32 0, %v281
      %v291 = vsel %vm289, %v290, %v281
      %v292 = vshrl.u32 %v291, 4
      %v293 = vand.u32 %v291, 15
      %v294 = vsub.s32 0, %v293
      %v295 = vsel %vm289, %v294, %v293
      %vm296 = vcmp.ne.s32.totalorder %v288, 0
      %vm297 = vcmp.ne.s32.totalorder %v295, 0
      %vm298 = vcmp.lt.s32.totalorder %v288, 0
      %vm299 = vcmp.lt.s32.totalorder %v295, 0
      %vm300 = vmand %vm298, %vm296
      %vm301 = vmand %vm299, %vm297
      %v302 = vadd.s32 %v288, 16
      %v303 = vadd.s32 %v295, 16
      %v304 = vsel %vm300, %v302, %v288
      %v305 = vsel %vm301, %v303, %v295
      %vm306 = vcmp.gt.s32.totalorder %v304, 0
      %vm307 = vcmp.gt.s32.totalorder %v305, 0
      %v308 = vsel %vm306, 1, 0
      %v309 = vsel %vm307, 1, 0
      %v310 = vcvt.s32.f32 %v308
      %v311 = vcvt.s32.f32 %v309
      %vm312 = vcmp.lt.s32.totalorder %v304, 15
      %vm313 = vcmp.lt.s32.totalorder %v305, 15
      %v314 = vsel %vm312, 1, 0
      %v315 = vsel %vm313, 1, 0
      %v316 = vcvt.s32.f32 %v314
      %v317 = vcvt.s32.f32 %v315
      %318 = vst [vmem:[#allocation2] sm:$0xff] 0.0
      %319 = vst [vmem:[#allocation2 + $0x20] sm:$0xff] 0.0
      %320 = vst [vmem:[#allocation2 + $0x18] sm:$0xff] 0.0
      %321 = vst [vmem:[#allocation2 + $0x38] sm:$0xff] 0.0
      %v322 = vld [vmem:[%s273] sm:$0xff]
      %v323 = vld [vmem:[%s273 + $0x8] sm:$0xff]
      %v324 = vld [vmem:[%s273 + $0x10] sm:$0xff]
      %v325 = vld [vmem:[%s273 + $0x18] sm:$0xff]
      %326 = vst [vmem:[#allocation2 + $0x8] sm:$0xff] %v322
      %327 = vst [vmem:[#allocation2 + $0x10] sm:$0xff] %v323
      %328 = vst [vmem:[#allocation2 + $0x28] sm:$0xff] %v324
      %329 = vst [vmem:[#allocation2 + $0x30] sm:$0xff] %v325
      %v330 = vld [vmem:[#allocation2] sm:$0xff]
      %v331 = vld [vmem:[#allocation2 + $0x8] sm:$0xff]
      %v332 = vld [vmem:[#allocation2 + $0x10] sm:$0xff]
      %v333 = vld [vmem:[#allocation2 + $0x20] sm:$0xff]
      %v334 = vld [vmem:[#allocation2 + $0x28] sm:$0xff]
      %v335 = vld [vmem:[#allocation2 + $0x30] sm:$0xff]
      %338 = vrot.lane.b32.xlu0 %v310, 111
      %v339 = vpop.permute.xlu0 %338
      %340 = vrot.lane.b32.xlu0 %v311, 111
      %v341 = vpop.permute.xlu0 %340
      %vm342 = vcmask 908288
      %v343 = vsel %vm342, %v339, %v341
      %v347 = vmul.f32 %v330, %v339
      %v348 = vmul.f32 %v331, %v343
      %v349 = vmul.f32 %v332, %v341
      %v350 = vmul.f32 %v333, %v339
      %v351 = vmul.f32 %v334, %v343
      %v352 = vmul.f32 %v335, %v341
      %359 = vrot.lane.b32.xlu0 %v347, 17
      %v360 = vpop.permute.xlu0 %359
      %361 = vrot.lane.b32.xlu0 %v348, 17
      %v362 = vpop.permute.xlu0 %361
      %363 = vrot.lane.b32.xlu0 %v349, 17
      %v364 = vpop.permute.xlu0 %363
      %365 = vrot.lane.b32.xlu0 %v350, 17
      %v366 = vpop.permute.xlu0 %365
      %367 = vrot.lane.b32.xlu0 %v351, 17
      %v368 = vpop.permute.xlu0 %367
      %369 = vrot.lane.b32.xlu0 %v352, 17
      %v370 = vpop.permute.xlu0 %369
      %vm371 = vcmask 138240
      %v372 = vsel %vm371, %v360, %v362
      %v373 = vsel %vm371, %v362, %v364
      %v374 = vsel %vm371, %v366, %v368
      %v375 = vsel %vm371, %v368, %v370
      %380 = vst [vmem:[#allocation3] sm:$0xff] %v372
      %381 = vst [vmem:[#allocation3 + $0x8] sm:$0xff] %v373
      %382 = vst [vmem:[#allocation3 + $0x10] sm:$0xff] %v374
      %383 = vst [vmem:[#allocation3 + $0x18] sm:$0xff] %v375
      %v384 = vld [vmem:[#allocation2] sm:$0xff]
      %v385 = vld [vmem:[#allocation2 + $0x8] sm:$0xff]
      %v386 = vld [vmem:[#allocation2 + $0x10] sm:$0xff]
      %v387 = vld [vmem:[#allocation2 + $0x20] sm:$0xff]
      %v388 = vld [vmem:[#allocation2 + $0x28] sm:$0xff]
      %v389 = vld [vmem:[#allocation2 + $0x30] sm:$0xff]
      %396 = vrot.lane.b32.xlu0 %v384, 16
      %v397 = vpop.permute.xlu0 %396
      %398 = vrot.lane.b32.xlu0 %v385, 16
      %v399 = vpop.permute.xlu0 %398
      %400 = vrot.lane.b32.xlu0 %v386, 16
      %v401 = vpop.permute.xlu0 %400
      %402 = vrot.lane.b32.xlu0 %v387, 16
      %v403 = vpop.permute.xlu0 %402
      %404 = vrot.lane.b32.xlu0 %v388, 16
      %v405 = vpop.permute.xlu0 %404
      %406 = vrot.lane.b32.xlu0 %v389, 16
      %v407 = vpop.permute.xlu0 %406
      %vm408 = vcmask 130048
      %v409 = vsel %vm408, %v397, %v399
      %v410 = vsel %vm408, %v399, %v401
      %v411 = vsel %vm408, %v403, %v405
      %v412 = vsel %vm408, %v405, %v407
      %417 = vst [vmem:[#allocation3 + $0x20] sm:$0xff] %v409
      %418 = vst [vmem:[#allocation3 + $0x28] sm:$0xff] %v410
      %419 = vst [vmem:[#allocation3 + $0x30] sm:$0xff] %v411
      %420 = vst [vmem:[#allocation3 + $0x38] sm:$0xff] %v412
      %v421 = vld [vmem:[#allocation2] sm:$0xff]
      %v422 = vld [vmem:[#allocation2 + $0x8] sm:$0xff]
      %v423 = vld [vmem:[#allocation2 + $0x10] sm:$0xff]
      %v424 = vld [vmem:[#allocation2 + $0x20] sm:$0xff]
      %v425 = vld [vmem:[#allocation2 + $0x28] sm:$0xff]
      %v426 = vld [vmem:[#allocation2 + $0x30] sm:$0xff]
      %429 = vrot.lane.b32.xlu0 %v316, 113
      %v430 = vpop.permute.xlu0 %429
      %431 = vrot.lane.b32.xlu0 %v317, 113
      %v432 = vpop.permute.xlu0 %431
      %vm433 = vcmask 924672
      %v434 = vsel %vm433, %v430, %v432
      %v438 = vmul.f32 %v421, %v430
      %v439 = vmul.f32 %v422, %v434
      %v440 = vmul.f32 %v423, %v432
      %v441 = vmul.f32 %v424, %v430
      %v442 = vmul.f32 %v425, %v434
      %v443 = vmul.f32 %v426, %v432
      %450 = vrot.lane.b32.xlu0 %v438, 15
      %v451 = vpop.permute.xlu0 %450
      %452 = vrot.lane.b32.xlu0 %v439, 15
      %v453 = vpop.permute.xlu0 %452
      %454 = vrot.lane.b32.xlu0 %v440, 15
      %v455 = vpop.permute.xlu0 %454
      %456 = vrot.lane.b32.xlu0 %v441, 15
      %v457 = vpop.permute.xlu0 %456
      %458 = vrot.lane.b32.xlu0 %v442, 15
      %v459 = vpop.permute.xlu0 %458
      %460 = vrot.lane.b32.xlu0 %v443, 15
      %v461 = vpop.permute.xlu0 %460
      %vm462 = vcmask 121856
      %v463 = vsel %vm462, %v451, %v453
      %v464 = vsel %vm462, %v453, %v455
      %v465 = vsel %vm462, %v457, %v459
      %v466 = vsel %vm462, %v459, %v461
      %471 = vst [vmem:[#allocation3 + $0x40] sm:$0xff] %v463
      %472 = vst [vmem:[#allocation3 + $0x48] sm:$0xff] %v464
      %473 = vst [vmem:[#allocation3 + $0x50] sm:$0xff] %v465
      %474 = vst [vmem:[#allocation3 + $0x58] sm:$0xff] %v466
      %v475 = vld [vmem:[#allocation2] sm:$0xff]
      %v476 = vld [vmem:[#allocation2 + $0x8] sm:$0xff]
      %v477 = vld [vmem:[#allocation2 + $0x10] sm:$0xff]
      %v478 = vld [vmem:[#allocation2 + $0x20] sm:$0xff]
      %v479 = vld [vmem:[#allocation2 + $0x28] sm:$0xff]
      %v480 = vld [vmem:[#allocation2 + $0x30] sm:$0xff]
      %481 = vrot.lane.b32.xlu0 %v310, 127
      %v482 = vpop.permute.xlu0 %481
      %483 = vrot.lane.b32.xlu0 %v311, 127
      %v484 = vpop.permute.xlu0 %483
      %vm485 = vcmask 1039360
      %v486 = vsel %vm485, %v482, %v484
      %v490 = vmul.f32 %v475, %v482
      %v491 = vmul.f32 %v476, %v486
      %v492 = vmul.f32 %v477, %v484
      %v493 = vmul.f32 %v478, %v482
      %v494 = vmul.f32 %v479, %v486
      %v495 = vmul.f32 %v480, %v484
      %502 = vrot.lane.b32.xlu0 %v490, 1
      %v503 = vpop.permute.xlu0 %502
      %504 = vrot.lane.b32.xlu0 %v491, 1
      %v505 = vpop.permute.xlu0 %504
      %506 = vrot.lane.b32.xlu0 %v492, 1
      %v507 = vpop.permute.xlu0 %506
      %508 = vrot.lane.b32.xlu0 %v493, 1
      %v509 = vpop.permute.xlu0 %508
      %510 = vrot.lane.b32.xlu0 %v494, 1
      %v511 = vpop.permute.xlu0 %510
      %512 = vrot.lane.b32.xlu0 %v495, 1
      %v513 = vpop.permute.xlu0 %512
      %vm514 = vcmask 7168
      %v515 = vsel %vm514, %v503, %v505
      %v516 = vsel %vm514, %v505, %v507
      %v517 = vsel %vm514, %v509, %v511
      %v518 = vsel %vm514, %v511, %v513
      %523 = vst [vmem:[#allocation3 + $0x60] sm:$0xff] %v515
      %524 = vst [vmem:[#allocation3 + $0x68] sm:$0xff] %v516
      %525 = vst [vmem:[#allocation3 + $0x70] sm:$0xff] %v517
      %526 = vst [vmem:[#allocation3 + $0x78] sm:$0xff] %v518
      %v527 = vld [vmem:[#allocation2 + $0x8] sm:$0xff]
      %v528 = vld [vmem:[#allocation2 + $0x10] sm:$0xff]
      %v529 = vld [vmem:[#allocation2 + $0x28] sm:$0xff]
      %v530 = vld [vmem:[#allocation2 + $0x30] sm:$0xff]
      %531 = vst [vmem:[#allocation3 + $0x80] sm:$0xff] %v527
      %532 = vst [vmem:[#allocation3 + $0x88] sm:$0xff] %v528
      %533 = vst [vmem:[#allocation3 + $0x90] sm:$0xff] %v529
      %534 = vst [vmem:[#allocation3 + $0x98] sm:$0xff] %v530
      %v535 = vld [vmem:[#allocation2 + $0x8] sm:$0xff]
      %v536 = vld [vmem:[#allocation2 + $0x10] sm:$0xff]
      %v537 = vld [vmem:[#allocation2 + $0x18] sm:$0xff]
      %v538 = vld [vmem:[#allocation2 + $0x28] sm:$0xff]
      %v539 = vld [vmem:[#allocation2 + $0x30] sm:$0xff]
      %v540 = vld [vmem:[#allocation2 + $0x38] sm:$0xff]
      %541 = vrot.lane.b32.xlu0 %v316, 1
      %v542 = vpop.permute.xlu0 %541
      %543 = vrot.lane.b32.xlu0 %v317, 1
      %v544 = vpop.permute.xlu0 %543
      %v545 = vsel %vm514, %v542, %v544
      %v549 = vmul.f32 %v535, %v542
      %v550 = vmul.f32 %v536, %v545
      %v551 = vmul.f32 %v537, %v544
      %v552 = vmul.f32 %v538, %v542
      %v553 = vmul.f32 %v539, %v545
      %v554 = vmul.f32 %v540, %v544
      %561 = vrot.lane.b32.xlu0 %v549, 127
      %v562 = vpop.permute.xlu0 %561
      %563 = vrot.lane.b32.xlu0 %v550, 127
      %v564 = vpop.permute.xlu0 %563
      %565 = vrot.lane.b32.xlu0 %v551, 127
      %v566 = vpop.permute.xlu0 %565
      %567 = vrot.lane.b32.xlu0 %v552, 127
      %v568 = vpop.permute.xlu0 %567
      %569 = vrot.lane.b32.xlu0 %v553, 127
      %v570 = vpop.permute.xlu0 %569
      %571 = vrot.lane.b32.xlu0 %v554, 127
      %v572 = vpop.permute.xlu0 %571
      %v573 = vsel %vm485, %v562, %v564
      %v574 = vsel %vm485, %v564, %v566
      %v575 = vsel %vm485, %v568, %v570
      %v576 = vsel %vm485, %v570, %v572
      %581 = vst [vmem:[#allocation3 + $0xa0] sm:$0xff] %v573
      %582 = vst [vmem:[#allocation3 + $0xa8] sm:$0xff] %v574
      %583 = vst [vmem:[#allocation3 + $0xb0] sm:$0xff] %v575
      %584 = vst [vmem:[#allocation3 + $0xb8] sm:$0xff] %v576
      %v585 = vld [vmem:[#allocation2 + $0x8] sm:$0xff]
      %v586 = vld [vmem:[#allocation2 + $0x10] sm:$0xff]
      %v587 = vld [vmem:[#allocation2 + $0x18] sm:$0xff]
      %v588 = vld [vmem:[#allocation2 + $0x28] sm:$0xff]
      %v589 = vld [vmem:[#allocation2 + $0x30] sm:$0xff]
      %v590 = vld [vmem:[#allocation2 + $0x38] sm:$0xff]
      %591 = vrot.lane.b32.xlu0 %v310, 15
      %v592 = vpop.permute.xlu0 %591
      %593 = vrot.lane.b32.xlu0 %v311, 15
      %v594 = vpop.permute.xlu0 %593
      %v595 = vsel %vm462, %v592, %v594
      %v599 = vmul.f32 %v585, %v592
      %v600 = vmul.f32 %v586, %v595
      %v601 = vmul.f32 %v587, %v594
      %v602 = vmul.f32 %v588, %v592
      %v603 = vmul.f32 %v589, %v595
      %v604 = vmul.f32 %v590, %v594
      %611 = vrot.lane.b32.xlu0 %v599, 113
      %v612 = vpop.permute.xlu0 %611
      %613 = vrot.lane.b32.xlu0 %v600, 113
      %v614 = vpop.permute.xlu0 %613
      %615 = vrot.lane.b32.xlu0 %v601, 113
      %v616 = vpop.permute.xlu0 %615
      %617 = vrot.lane.b32.xlu0 %v602, 113
      %v618 = vpop.permute.xlu0 %617
      %619 = vrot.lane.b32.xlu0 %v603, 113
      %v620 = vpop.permute.xlu0 %619
      %621 = vrot.lane.b32.xlu0 %v604, 113
      %v622 = vpop.permute.xlu0 %621
      %v623 = vsel %vm433, %v612, %v614
      %v624 = vsel %vm433, %v614, %v616
      %v625 = vsel %vm433, %v618, %v620
      %v626 = vsel %vm433, %v620, %v622
      %631 = vst [vmem:[#allocation3 + $0xc0] sm:$0xff] %v623
      %632 = vst [vmem:[#allocation3 + $0xc8] sm:$0xff] %v624
      %633 = vst [vmem:[#allocation3 + $0xd0] sm:$0xff] %v625
      %634 = vst [vmem:[#allocation3 + $0xd8] sm:$0xff] %v626
      %v635 = vld [vmem:[#allocation2 + $0x8] sm:$0xff]
      %v636 = vld [vmem:[#allocation2 + $0x10] sm:$0xff]
      %v637 = vld [vmem:[#allocation2 + $0x18] sm:$0xff]
      %v638 = vld [vmem:[#allocation2 + $0x28] sm:$0xff]
      %v639 = vld [vmem:[#allocation2 + $0x30] sm:$0xff]
      %v640 = vld [vmem:[#allocation2 + $0x38] sm:$0xff]
      %647 = vrot.lane.b32.xlu0 %v635, 112
      %v648 = vpop.permute.xlu0 %647
      %649 = vrot.lane.b32.xlu0 %v636, 112
      %v650 = vpop.permute.xlu0 %649
      %651 = vrot.lane.b32.xlu0 %v637, 112
      %v652 = vpop.permute.xlu0 %651
      %653 = vrot.lane.b32.xlu0 %v638, 112
      %v654 = vpop.permute.xlu0 %653
      %655 = vrot.lane.b32.xlu0 %v639, 112
      %v656 = vpop.permute.xlu0 %655
      %657 = vrot.lane.b32.xlu0 %v640, 112
      %v658 = vpop.permute.xlu0 %657
      %vm659 = vcmask 916480
      %v660 = vsel %vm659, %v648, %v650
      %v661 = vsel %vm659, %v650, %v652
      %v662 = vsel %vm659, %v654, %v656
      %v663 = vsel %vm659, %v656, %v658
      %668 = vst [vmem:[#allocation3 + $0xe0] sm:$0xff] %v660
      %669 = vst [vmem:[#allocation3 + $0xe8] sm:$0xff] %v661
      %670 = vst [vmem:[#allocation3 + $0xf0] sm:$0xff] %v662
      %671 = vst [vmem:[#allocation3 + $0xf8] sm:$0xff] %v663
      %v672 = vld [vmem:[#allocation2 + $0x8] sm:$0xff]
      %v673 = vld [vmem:[#allocation2 + $0x10] sm:$0xff]
      %v674 = vld [vmem:[#allocation2 + $0x18] sm:$0xff]
      %v675 = vld [vmem:[#allocation2 + $0x28] sm:$0xff]
      %v676 = vld [vmem:[#allocation2 + $0x30] sm:$0xff]
      %v677 = vld [vmem:[#allocation2 + $0x38] sm:$0xff]
      %678 = vrot.lane.b32.xlu0 %v316, 17
      %v679 = vpop.permute.xlu0 %678
      %680 = vrot.lane.b32.xlu0 %v317, 17
      %v681 = vpop.permute.xlu0 %680
      %v682 = vsel %vm371, %v679, %v681
      %v686 = vmul.f32 %v672, %v679
      %v687 = vmul.f32 %v673, %v682
      %v688 = vmul.f32 %v674, %v681
      %v689 = vmul.f32 %v675, %v679
      %v690 = vmul.f32 %v676, %v682
      %v691 = vmul.f32 %v677, %v681
      %698 = vrot.lane.b32.xlu0 %v686, 111
      %v699 = vpop.permute.xlu0 %698
      %700 = vrot.lane.b32.xlu0 %v687, 111
      %v701 = vpop.permute.xlu0 %700
      %702 = vrot.lane.b32.xlu0 %v688, 111
      %v703 = vpop.permute.xlu0 %702
      %704 = vrot.lane.b32.xlu0 %v689, 111
      %v705 = vpop.permute.xlu0 %704
      %706 = vrot.lane.b32.xlu0 %v690, 111
      %v707 = vpop.permute.xlu0 %706
      %708 = vrot.lane.b32.xlu0 %v691, 111
      %v709 = vpop.permute.xlu0 %708
      %v710 = vsel %vm342, %v699, %v701
      %v711 = vsel %vm342, %v701, %v703
      %v712 = vsel %vm342, %v705, %v707
      %v713 = vsel %vm342, %v707, %v709
      %718 = vst [vmem:[#allocation3 + $0x100] sm:$0xff] %v710
      %719 = vst [vmem:[#allocation3 + $0x108] sm:$0xff] %v711
      %720 = vst [vmem:[#allocation3 + $0x110] sm:$0xff] %v712
      %721 = vst [vmem:[#allocation3 + $0x118] sm:$0xff] %v713
      %v722 = vld [vmem:[%s1] sm:$0xff]
      %v723 = vld [vmem:[%s1 + $0x8] sm:$0xff]
      %v724 = vld [vmem:[%s1 + $0x10] sm:$0xff]
      %v725 = vld [vmem:[%s1 + $0x18] sm:$0xff]
      %v726 = vld [vmem:[#allocation3] sm:$0xff]
      %v727 = vld [vmem:[#allocation3 + $0x8] sm:$0xff]
      %v728 = vld [vmem:[#allocation3 + $0x10] sm:$0xff]
      %v729 = vld [vmem:[#allocation3 + $0x18] sm:$0xff]
      %v730 = vld [vmem:[#allocation3 + $0x20] sm:$0xff]
      %v731 = vld [vmem:[#allocation3 + $0x28] sm:$0xff]
      %v732 = vld [vmem:[#allocation3 + $0x30] sm:$0xff]
      %v733 = vld [vmem:[#allocation3 + $0x38] sm:$0xff]
      %v734 = vld [vmem:[#allocation3 + $0x40] sm:$0xff]
      %v735 = vld [vmem:[#allocation3 + $0x48] sm:$0xff]
      %v736 = vld [vmem:[#allocation3 + $0x50] sm:$0xff]
      %v737 = vld [vmem:[#allocation3 + $0x58] sm:$0xff]
      %v738 = vld [vmem:[#allocation3 + $0x60] sm:$0xff]
      %v739 = vld [vmem:[#allocation3 + $0x68] sm:$0xff]
      %v740 = vld [vmem:[#allocation3 + $0x70] sm:$0xff]
      %v741 = vld [vmem:[#allocation3 + $0x78] sm:$0xff]
      %v742 = vld [vmem:[#allocation3 + $0x80] sm:$0xff]
      %v743 = vld [vmem:[#allocation3 + $0x88] sm:$0xff]
      %v744 = vld [vmem:[#allocation3 + $0x90] sm:$0xff]
      %v745 = vld [vmem:[#allocation3 + $0x98] sm:$0xff]
      %v746 = vld [vmem:[#allocation3 + $0xa0] sm:$0xff]
      %v747 = vld [vmem:[#allocation3 + $0xa8] sm:$0xff]
      %v748 = vld [vmem:[#allocation3 + $0xb0] sm:$0xff]
      %v749 = vld [vmem:[#allocation3 + $0xb8] sm:$0xff]
      %v750 = vld [vmem:[#allocation3 + $0xc0] sm:$0xff]
      %v751 = vld [vmem:[#allocation3 + $0xc8] sm:$0xff]
      %v752 = vld [vmem:[#allocation3 + $0xd0] sm:$0xff]
      %v753 = vld [vmem:[#allocation3 + $0xd8] sm:$0xff]
      %v754 = vld [vmem:[#allocation3 + $0xe0] sm:$0xff]
      %v755 = vld [vmem:[#allocation3 + $0xe8] sm:$0xff]
      %v756 = vld [vmem:[#allocation3 + $0xf0] sm:$0xff]
      %v757 = vld [vmem:[#allocation3 + $0xf8] sm:$0xff]
      %v758 = vld [vmem:[#allocation3 + $0x100] sm:$0xff]
      %v759 = vld [vmem:[#allocation3 + $0x108] sm:$0xff]
      %v760 = vld [vmem:[#allocation3 + $0x110] sm:$0xff]
      %v761 = vld [vmem:[#allocation3 + $0x118] sm:$0xff]
      %v763 = vsel %vm408, %v723, 0
      %v766 = vsel %vm408, %v725, 0
      %768 = vmatprep.subr.mxu0 %v727
      %769 = vmatpush1.msra.mxu0 %v726
      %770 = vmatprep.subr.mxu0 %v729
      %771 = vmatpush1.msra.mxu0 %v728
      %772 = vmatprep.subr.mxu0 %v731
      %773 = vmatpush1.msra.mxu0 %v730
      %774 = vmatprep.subr.mxu0 %v733
      %775 = vmatpush1.msra.mxu0 %v732
      %776 = vmatprep.subr.mxu0 %v735
      %777 = vmatpush1.msra.mxu0 %v734
      %778 = vmatprep.subr.mxu0 %v737
      %779 = vmatpush1.msra.mxu0 %v736
      %780 = vmatprep.subr.mxu0 %v739
      %781 = vmatpush1.msra.mxu0 %v738
      %782 = vmatprep.subr.mxu0 %v741
      %783 = vmatpush1.msra.mxu0 %v740
      %784 = vmatprep.subr.mxu0 %v743
      %785 = vmatpush1.msra.mxu0 %v742
      %786 = vmatprep.subr.mxu0 %v745
      %787 = vmatpush1.msra.mxu0 %v744
      %788 = vmatprep.subr.mxu0 %v747
      %789 = vmatpush1.msra.mxu0 %v746
      %790 = vmatprep.subr.mxu0 %v749
      %791 = vmatpush1.msra.mxu0 %v748
      %792 = vmatprep.subr.mxu0 %v751
      %793 = vmatpush1.msra.mxu0 %v750
      %794 = vmatprep.subr.mxu0 %v753
      %795 = vmatpush1.msra.mxu0 %v752
      %796 = vmatprep.subr.mxu0 %v755
      %797 = vmatpush1.msra.mxu0 %v754
      %798 = vmatprep.subr.mxu0 %v757
      %799 = vmatpush1.msra.mxu0 %v756
      %800 = vmatprep.subr.mxu0 %v759
      %801 = vmatpush1.msra.mxu0 %v758
      %802 = vmatprep.subr.mxu0 %v761
      %803 = vmatpush1.msra.mxu0 %v760
      %804 = vmatprep.subr.mxu0 0.0
      %805 = vmatpush1.msra.mxu0 0.0
      %806 = vmatprep.subr.mxu0 0.0
      %807 = vmatpush1.msra.mxu0 0.0
      %808 = vmatprep.subr.mxu0 0.0
      %809 = vmatpush1.msra.mxu0 0.0
      %810 = vmatprep.subr.mxu0 0.0
      %811 = vmatpush1.msra.mxu0 0.0
      %812 = vmatprep.subr.mxu0 0.0
      %813 = vmatpush1.msra.mxu0 0.0
      %814 = vmatprep.subr.mxu0 0.0
      %815 = vmatpush1.msra.mxu0 0.0
      %816 = vmatprep.subr.mxu0 0.0
      %817 = vmatpush1.msra.mxu0 0.0
      %818 = vmatprep.subr.mxu0 0.0
      %819 = vmatpush1.msra.mxu0 0.0
      %820 = vmatprep.subr.mxu0 0.0
      %821 = vmatpush1.msra.mxu0 0.0
      %822 = vmatprep.subr.mxu0 0.0
      %823 = vmatpush1.msra.mxu0 0.0
      %824 = vmatprep.subr.mxu0 0.0
      %825 = vmatpush1.msra.mxu0 0.0
      %826 = vmatprep.subr.mxu0 0.0
      %827 = vmatpush1.msra.mxu0 0.0
      %828 = vmatprep.subr.mxu0 0.0
      %829 = vmatpush1.msra.mxu0 0.0
      %830 = vmatprep.subr.mxu0 0.0
      %831 = vmatpush1.msra.mxu0 0.0
      %832 = vmatprep.mubr.f32.mxu0 %v763
      %833 = vmatmul.mubr.f32.gmra.mrb[0].mxu0 %v722
      %v834 = vpop.f32.mrb[0].mxu0
      %v835 = vadd.f32 0.0, %v834
      %v836 = vpop.f32.mrb[0].mxu0
      %v837 = vadd.f32 0.0, %v836
      %838 = vmatprep.mubr.f32.mxu0 %v766
      %839 = vmatmul.mubr.f32.gmra.mrb[0].mxu0 %v724
      %v840 = vpop.f32.mrb[0].mxu0
      %v841 = vadd.f32 0.0, %v840
      %v842 = vpop.f32.mrb[0].mxu0
      %v843 = vadd.f32 0.0, %v842
      %844 = vdwg.mxu0
      %v845 = vadd.f32 %v835, %v837
      %846 = vadd.xlane.f32.xlu0 %v845
      %v847 = vpop.xlane.xlu0 %846
      %v848 = vadd.f32 %v841, %v843
      %849 = vadd.xlane.f32.xlu0 %v848
      %v850 = vpop.xlane.xlu0 %849
      %v851 = vrcp.pop 256.0
      %v852 = vmul.f32 %v847, %v851
      %v853 = vmul.f32 %v850, %v851
      %v854 = vsub.f32 %v835, %v852
      %v855 = vsub.f32 %v837, %v852
      %v856 = vsub.f32 %v841, %v853
      %v857 = vsub.f32 %v843, %v853
      %v858 = vmul.f32 %v854, %v854
      %v859 = vmul.f32 %v855, %v855
      %v860 = vmul.f32 %v856, %v856
      %v861 = vmul.f32 %v857, %v857
      %v862 = vadd.f32 %v858, %v859
      %863 = vadd.xlane.f32.xlu0 %v862
      %v864 = vpop.xlane.xlu0 %863
      %v865 = vadd.f32 %v860, %v861
      %866 = vadd.xlane.f32.xlu0 %v865
      %v867 = vpop.xlane.xlu0 %866
      %v868 = vmul.f32 %v864, %v851
      %v869 = vmul.f32 %v867, %v851
      %v870 = vld [vmem:[%s2] sm:$0xff]
      %v871 = vld [vmem:[%s2 + $0x8] sm:$0xff]
      %v872 = vadd.f32 %v868, 1e-05
      %v873 = vadd.f32 %v869, 1e-05
      %v874 = vrsqrt.pop %v872
      %v875 = vrsqrt.pop %v873
      %v876 = vmul.f32 %v870, %v874
      %v877 = vmul.f32 %v871, %v875
      %879 = vset.pattern.permute.xlu0 0
      %880 = vperm.xlu0 %879, %v876
      %v881 = vpop.permute.xlu0 %880
      %884 = vset.pattern.permute.xlu0 0
      %885 = vperm.xlu0 %884, %v877
      %v886 = vpop.permute.xlu0 %885
      %v888 = vmul.f32 %v854, %v881
      %v889 = vmul.f32 %v855, %v881
      %v890 = vmul.f32 %v856, %v886
      %v891 = vmul.f32 %v857, %v886
      %v892 = vld [vmem:[%s3] sm:$0xff]
      %v893 = vld [vmem:[%s3 + $0x8] sm:$0xff]
      %895 = vset.pattern.permute.xlu0 0
      %896 = vperm.xlu0 %895, %v892
      %v897 = vpop.permute.xlu0 %896
      %900 = vset.pattern.permute.xlu0 0
      %901 = vperm.xlu0 %900, %v893
      %v902 = vpop.permute.xlu0 %901
      %v904 = vadd.f32 %v888, %v897
      %v905 = vadd.f32 %v889, %v897
      %v906 = vadd.f32 %v890, %v902
      %v907 = vadd.f32 %v891, %v902
      %vm908 = vcmp.ge.f32.partialorder %v904, 0.0
      %vm909 = vcmp.ge.f32.partialorder %v905, 0.0
      %vm910 = vcmp.ge.f32.partialorder %v906, 0.0
      %vm911 = vcmp.ge.f32.partialorder %v907, 0.0
      %v912 = vmul.f32 %v904, 0.01
      %v913 = vmul.f32 %v905, 0.01
      %v914 = vmul.f32 %v906, 0.01
      %v915 = vmul.f32 %v907, 0.01
      %v916 = vsel %vm908, %v904, %v912
      %v917 = vsel %vm909, %v905, %v913
      %v918 = vsel %vm910, %v906, %v914
      %v919 = vsel %vm911, %v907, %v915
      %920 = vst [vmem:[#allocation2 + $0x8] sm:$0xff] %v916
      %921 = vst [vmem:[#allocation2 + $0x10] sm:$0xff] %v917
      %922 = vst [vmem:[#allocation2 + $0x28] sm:$0xff] %v918
      %923 = vst [vmem:[#allocation2 + $0x30] sm:$0xff] %v919
      %v924 = vld [vmem:[#allocation2] sm:$0xff]
      %v925 = vld [vmem:[#allocation2 + $0x8] sm:$0xff]
      %v926 = vld [vmem:[#allocation2 + $0x10] sm:$0xff]
      %v927 = vld [vmem:[#allocation2 + $0x20] sm:$0xff]
      %v928 = vld [vmem:[#allocation2 + $0x28] sm:$0xff]
      %v929 = vld [vmem:[#allocation2 + $0x30] sm:$0xff]
      %v930 = vmul.f32 %v924, %v339
      %v931 = vmul.f32 %v925, %v343
      %v932 = vmul.f32 %v926, %v341
      %v933 = vmul.f32 %v927, %v339
      %v934 = vmul.f32 %v928, %v343
      %v935 = vmul.f32 %v929, %v341
      %942 = vrot.lane.b32.xlu0 %v930, 17
      %v943 = vpop.permute.xlu0 %942
      %944 = vrot.lane.b32.xlu0 %v931, 17
      %v945 = vpop.permute.xlu0 %944
      %946 = vrot.lane.b32.xlu0 %v932, 17
      %v947 = vpop.permute.xlu0 %946
      %948 = vrot.lane.b32.xlu0 %v933, 17
      %v949 = vpop.permute.xlu0 %948
      %950 = vrot.lane.b32.xlu0 %v934, 17
      %v951 = vpop.permute.xlu0 %950
      %952 = vrot.lane.b32.xlu0 %v935, 17
      %v953 = vpop.permute.xlu0 %952
      %v954 = vsel %vm371, %v943, %v945
      %v955 = vsel %vm371, %v945, %v947
      %v956 = vsel %vm371, %v949, %v951
      %v957 = vsel %vm371, %v951, %v953
      %962 = vst [vmem:[#allocation3] sm:$0xff] %v954
      %963 = vst [vmem:[#allocation3 + $0x8] sm:$0xff] %v955
      %964 = vst [vmem:[#allocation3 + $0x10] sm:$0xff] %v956
      %965 = vst [vmem:[#allocation3 + $0x18] sm:$0xff] %v957
      %v966 = vld [vmem:[#allocation2] sm:$0xff]
      %v967 = vld [vmem:[#allocation2 + $0x8] sm:$0xff]
      %v968 = vld [vmem:[#allocation2 + $0x10] sm:$0xff]
      %v969 = vld [vmem:[#allocation2 + $0x20] sm:$0xff]
      %v970 = vld [vmem:[#allocation2 + $0x28] sm:$0xff]
      %v971 = vld [vmem:[#allocation2 + $0x30] sm:$0xff]
      %978 = vrot.lane.b32.xlu0 %v966, 16
      %v979 = vpop.permute.xlu0 %978
      %980 = vrot.lane.b32.xlu0 %v967, 16
      %v981 = vpop.permute.xlu0 %980
      %982 = vrot.lane.b32.xlu0 %v968, 16
      %v983 = vpop.permute.xlu0 %982
      %984 = vrot.lane.b32.xlu0 %v969, 16
      %v985 = vpop.permute.xlu0 %984
      %986 = vrot.lane.b32.xlu0 %v970, 16
      %v987 = vpop.permute.xlu0 %986
      %988 = vrot.lane.b32.xlu0 %v971, 16
      %v989 = vpop.permute.xlu0 %988
      %v990 = vsel %vm408, %v979, %v981
      %v991 = vsel %vm408, %v981, %v983
      %v992 = vsel %vm408, %v985, %v987
      %v993 = vsel %vm408, %v987, %v989
      %998 = vst [vmem:[#allocation3 + $0x20] sm:$0xff] %v990
      %999 = vst [vmem:[#allocation3 + $0x28] sm:$0xff] %v991
      %1000 = vst [vmem:[#allocation3 + $0x30] sm:$0xff] %v992
      %1001 = vst [vmem:[#allocation3 + $0x38] sm:$0xff] %v993
      %v1002 = vld [vmem:[#allocation2] sm:$0xff]
      %v1003 = vld [vmem:[#allocation2 + $0x8] sm:$0xff]
      %v1004 = vld [vmem:[#allocation2 + $0x10] sm:$0xff]
      %v1005 = vld [vmem:[#allocation2 + $0x20] sm:$0xff]
      %v1006 = vld [vmem:[#allocation2 + $0x28] sm:$0xff]
      %v1007 = vld [vmem:[#allocation2 + $0x30] sm:$0xff]
      %v1008 = vmul.f32 %v1002, %v430
      %v1009 = vmul.f32 %v1003, %v434
      %v1010 = vmul.f32 %v1004, %v432
      %v1011 = vmul.f32 %v1005, %v430
      %v1012 = vmul.f32 %v1006, %v434
      %v1013 = vmul.f32 %v1007, %v432
      %1020 = vrot.lane.b32.xlu0 %v1008, 15
      %v1021 = vpop.permute.xlu0 %1020
      %1022 = vrot.lane.b32.xlu0 %v1009, 15
      %v1023 = vpop.permute.xlu0 %1022
      %1024 = vrot.lane.b32.xlu0 %v1010, 15
      %v1025 = vpop.permute.xlu0 %1024
      %1026 = vrot.lane.b32.xlu0 %v1011, 15
      %v1027 = vpop.permute.xlu0 %1026
      %1028 = vrot.lane.b32.xlu0 %v1012, 15
      %v1029 = vpop.permute.xlu0 %1028
      %1030 = vrot.lane.b32.xlu0 %v1013, 15
      %v1031 = vpop.permute.xlu0 %1030
      %v1032 = vsel %vm462, %v1021, %v1023
      %v1033 = vsel %vm462, %v1023, %v1025
      %v1034 = vsel %vm462, %v1027, %v1029
      %v1035 = vsel %vm462, %v1029, %v1031
      %1040 = vst [vmem:[#allocation3 + $0x40] sm:$0xff] %v1032
      %1041 = vst [vmem:[#allocation3 + $0x48] sm:$0xff] %v1033
      %1042 = vst [vmem:[#allocation3 + $0x50] sm:$0xff] %v1034
      %1043 = vst [vmem:[#allocation3 + $0x58] sm:$0xff] %v1035
      %v1044 = vld [vmem:[#allocation2] sm:$0xff]
      %v1045 = vld [vmem:[#allocation2 + $0x8] sm:$0xff]
      %v1046 = vld [vmem:[#allocation2 + $0x10] sm:$0xff]
      %v1047 = vld [vmem:[#allocation2 + $0x20] sm:$0xff]
      %v1048 = vld [vmem:[#allocation2 + $0x28] sm:$0xff]
      %v1049 = vld [vmem:[#allocation2 + $0x30] sm:$0xff]
      %v1050 = vmul.f32 %v1044, %v482
      %v1051 = vmul.f32 %v1045, %v486
      %v1052 = vmul.f32 %v1046, %v484
      %v1053 = vmul.f32 %v1047, %v482
      %v1054 = vmul.f32 %v1048, %v486
      %v1055 = vmul.f32 %v1049, %v484
      %1062 = vrot.lane.b32.xlu0 %v1050, 1
      %v1063 = vpop.permute.xlu0 %1062
      %1064 = vrot.lane.b32.xlu0 %v1051, 1
      %v1065 = vpop.permute.xlu0 %1064
      %1066 = vrot.lane.b32.xlu0 %v1052, 1
      %v1067 = vpop.permute.xlu0 %1066
      %1068 = vrot.lane.b32.xlu0 %v1053, 1
      %v1069 = vpop.permute.xlu0 %1068
      %1070 = vrot.lane.b32.xlu0 %v1054, 1
      %v1071 = vpop.permute.xlu0 %1070
      %1072 = vrot.lane.b32.xlu0 %v1055, 1
      %v1073 = vpop.permute.xlu0 %1072
      %v1074 = vsel %vm514, %v1063, %v1065
      %v1075 = vsel %vm514, %v1065, %v1067
      %v1076 = vsel %vm514, %v1069, %v1071
      %v1077 = vsel %vm514, %v1071, %v1073
      %1082 = vst [vmem:[#allocation3 + $0x60] sm:$0xff] %v1074
      %1083 = vst [vmem:[#allocation3 + $0x68] sm:$0xff] %v1075
      %1084 = vst [vmem:[#allocation3 + $0x70] sm:$0xff] %v1076
      %1085 = vst [vmem:[#allocation3 + $0x78] sm:$0xff] %v1077
      %v1086 = vld [vmem:[#allocation2 + $0x8] sm:$0xff]
      %v1087 = vld [vmem:[#allocation2 + $0x10] sm:$0xff]
      %v1088 = vld [vmem:[#allocation2 + $0x28] sm:$0xff]
      %v1089 = vld [vmem:[#allocation2 + $0x30] sm:$0xff]
      %1090 = vst [vmem:[#allocation3 + $0x80] sm:$0xff] %v1086
      %1091 = vst [vmem:[#allocation3 + $0x88] sm:$0xff] %v1087
      %1092 = vst [vmem:[#allocation3 + $0x90] sm:$0xff] %v1088
      %1093 = vst [vmem:[#allocation3 + $0x98] sm:$0xff] %v1089
      %v1094 = vld [vmem:[#allocation2 + $0x8] sm:$0xff]
      %v1095 = vld [vmem:[#allocation2 + $0x10] sm:$0xff]
      %v1096 = vld [vmem:[#allocation2 + $0x18] sm:$0xff]
      %v1097 = vld [vmem:[#allocation2 + $0x28] sm:$0xff]
      %v1098 = vld [vmem:[#allocation2 + $0x30] sm:$0xff]
      %v1099 = vld [vmem:[#allocation2 + $0x38] sm:$0xff]
      %v1100 = vmul.f32 %v1094, %v542
      %v1101 = vmul.f32 %v1095, %v545
      %v1102 = vmul.f32 %v1096, %v544
      %v1103 = vmul.f32 %v1097, %v542
      %v1104 = vmul.f32 %v1098, %v545
      %v1105 = vmul.f32 %v1099, %v544
      %1112 = vrot.lane.b32.xlu0 %v1100, 127
      %v1113 = vpop.permute.xlu0 %1112
      %1114 = vrot.lane.b32.xlu0 %v1101, 127
      %v1115 = vpop.permute.xlu0 %1114
      %1116 = vrot.lane.b32.xlu0 %v1102, 127
      %v1117 = vpop.permute.xlu0 %1116
      %1118 = vrot.lane.b32.xlu0 %v1103, 127
      %v1119 = vpop.permute.xlu0 %1118
      %1120 = vrot.lane.b32.xlu0 %v1104, 127
      %v1121 = vpop.permute.xlu0 %1120
      %1122 = vrot.lane.b32.xlu0 %v1105, 127
      %v1123 = vpop.permute.xlu0 %1122
      %v1124 = vsel %vm485, %v1113, %v1115
      %v1125 = vsel %vm485, %v1115, %v1117
      %v1126 = vsel %vm485, %v1119, %v1121
      %v1127 = vsel %vm485, %v1121, %v1123
      %1132 = vst [vmem:[#allocation3 + $0xa0] sm:$0xff] %v1124
      %1133 = vst [vmem:[#allocation3 + $0xa8] sm:$0xff] %v1125
      %1134 = vst [vmem:[#allocation3 + $0xb0] sm:$0xff] %v1126
      %1135 = vst [vmem:[#allocation3 + $0xb8] sm:$0xff] %v1127
      %v1136 = vld [vmem:[#allocation2 + $0x8] sm:$0xff]
      %v1137 = vld [vmem:[#allocation2 + $0x10] sm:$0xff]
      %v1138 = vld [vmem:[#allocation2 + $0x18] sm:$0xff]
      %v1139 = vld [vmem:[#allocation2 + $0x28] sm:$0xff]
      %v1140 = vld [vmem:[#allocation2 + $0x30] sm:$0xff]
      %v1141 = vld [vmem:[#allocation2 + $0x38] sm:$0xff]
      %v1142 = vmul.f32 %v1136, %v592
      %v1143 = vmul.f32 %v1137, %v595
      %v1144 = vmul.f32 %v1138, %v594
      %v1145 = vmul.f32 %v1139, %v592
      %v1146 = vmul.f32 %v1140, %v595
      %v1147 = vmul.f32 %v1141, %v594
      %1154 = vrot.lane.b32.xlu0 %v1142, 113
      %v1155 = vpop.permute.xlu0 %1154
      %1156 = vrot.lane.b32.xlu0 %v1143, 113
      %v1157 = vpop.permute.xlu0 %1156
      %1158 = vrot.lane.b32.xlu0 %v1144, 113
      %v1159 = vpop.permute.xlu0 %1158
      %1160 = vrot.lane.b32.xlu0 %v1145, 113
      %v1161 = vpop.permute.xlu0 %1160
      %1162 = vrot.lane.b32.xlu0 %v1146, 113
      %v1163 = vpop.permute.xlu0 %1162
      %1164 = vrot.lane.b32.xlu0 %v1147, 113
      %v1165 = vpop.permute.xlu0 %1164
      %v1166 = vsel %vm433, %v1155, %v1157
      %v1167 = vsel %vm433, %v1157, %v1159
      %v1168 = vsel %vm433, %v1161, %v1163
      %v1169 = vsel %vm433, %v1163, %v1165
      %1174 = vst [vmem:[#allocation3 + $0xc0] sm:$0xff] %v1166
      %1175 = vst [vmem:[#allocation3 + $0xc8] sm:$0xff] %v1167
      %1176 = vst [vmem:[#allocation3 + $0xd0] sm:$0xff] %v1168
      %1177 = vst [vmem:[#allocation3 + $0xd8] sm:$0xff] %v1169
      %v1178 = vld [vmem:[#allocation2 + $0x8] sm:$0xff]
      %v1179 = vld [vmem:[#allocation2 + $0x10] sm:$0xff]
      %v1180 = vld [vmem:[#allocation2 + $0x18] sm:$0xff]
      %v1181 = vld [vmem:[#allocation2 + $0x28] sm:$0xff]
      %v1182 = vld [vmem:[#allocation2 + $0x30] sm:$0xff]
      %v1183 = vld [vmem:[#allocation2 + $0x38] sm:$0xff]
      %1190 = vrot.lane.b32.xlu0 %v1178, 112
      %v1191 = vpop.permute.xlu0 %1190
      %1192 = vrot.lane.b32.xlu0 %v1179, 112
      %v1193 = vpop.permute.xlu0 %1192
      %1194 = vrot.lane.b32.xlu0 %v1180, 112
      %v1195 = vpop.permute.xlu0 %1194
      %1196 = vrot.lane.b32.xlu0 %v1181, 112
      %v1197 = vpop.permute.xlu0 %1196
      %1198 = vrot.lane.b32.xlu0 %v1182, 112
      %v1199 = vpop.permute.xlu0 %1198
      %1200 = vrot.lane.b32.xlu0 %v1183, 112
      %v1201 = vpop.permute.xlu0 %1200
      %v1202 = vsel %vm659, %v1191, %v1193
      %v1203 = vsel %vm659, %v1193, %v1195
      %v1204 = vsel %vm659, %v1197, %v1199
      %v1205 = vsel %vm659, %v1199, %v1201
      %1210 = vst [vmem:[#allocation3 + $0xe0] sm:$0xff] %v1202
      %1211 = vst [vmem:[#allocation3 + $0xe8] sm:$0xff] %v1203
      %1212 = vst [vmem:[#allocation3 + $0xf0] sm:$0xff] %v1204
      %1213 = vst [vmem:[#allocation3 + $0xf8] sm:$0xff] %v1205
      %v1214 = vld [vmem:[#allocation2 + $0x8] sm:$0xff]
      %v1215 = vld [vmem:[#allocation2 + $0x10] sm:$0xff]
      %v1216 = vld [vmem:[#allocation2 + $0x18] sm:$0xff]
      %v1217 = vld [vmem:[#allocation2 + $0x28] sm:$0xff]
      %v1218 = vld [vmem:[#allocation2 + $0x30] sm:$0xff]
      %v1219 = vld [vmem:[#allocation2 + $0x38] sm:$0xff]
      %v1220 = vmul.f32 %v1214, %v679
      %v1221 = vmul.f32 %v1215, %v682
      %v1222 = vmul.f32 %v1216, %v681
      %v1223 = vmul.f32 %v1217, %v679
      %v1224 = vmul.f32 %v1218, %v682
      %v1225 = vmul.f32 %v1219, %v681
      %1232 = vrot.lane.b32.xlu0 %v1220, 111
      %v1233 = vpop.permute.xlu0 %1232
      %1234 = vrot.lane.b32.xlu0 %v1221, 111
      %v1235 = vpop.permute.xlu0 %1234
      %1236 = vrot.lane.b32.xlu0 %v1222, 111
      %v1237 = vpop.permute.xlu0 %1236
      %1238 = vrot.lane.b32.xlu0 %v1223, 111
      %v1239 = vpop.permute.xlu0 %1238
      %1240 = vrot.lane.b32.xlu0 %v1224, 111
      %v1241 = vpop.permute.xlu0 %1240
      %1242 = vrot.lane.b32.xlu0 %v1225, 111
      %v1243 = vpop.permute.xlu0 %1242
      %v1244 = vsel %vm342, %v1233, %v1235
      %v1245 = vsel %vm342, %v1235, %v1237
      %v1246 = vsel %vm342, %v1239, %v1241
      %v1247 = vsel %vm342, %v1241, %v1243
      %1252 = vst [vmem:[#allocation3 + $0x100] sm:$0xff] %v1244
      %1253 = vst [vmem:[#allocation3 + $0x108] sm:$0xff] %v1245
      %1254 = vst [vmem:[#allocation3 + $0x110] sm:$0xff] %v1246
      %1255 = vst [vmem:[#allocation3 + $0x118] sm:$0xff] %v1247
      %v1256 = vld [vmem:[%s4] sm:$0xff]
      %v1257 = vld [vmem:[%s4 + $0x8] sm:$0xff]
      %v1258 = vld [vmem:[%s4 + $0x10] sm:$0xff]
      %v1259 = vld [vmem:[%s4 + $0x18] sm:$0xff]
      %v1260 = vld [vmem:[#allocation3] sm:$0xff]
      %v1261 = vld [vmem:[#allocation3 + $0x8] sm:$0xff]
      %v1262 = vld [vmem:[#allocation3 + $0x10] sm:$0xff]
      %v1263 = vld [vmem:[#allocation3 + $0x18] sm:$0xff]
      %v1264 = vld [vmem:[#allocation3 + $0x20] sm:$0xff]
      %v1265 = vld [vmem:[#allocation3 + $0x28] sm:$0xff]
      %v1266 = vld [vmem:[#allocation3 + $0x30] sm:$0xff]
      %v1267 = vld [vmem:[#allocation3 + $0x38] sm:$0xff]
      %v1268 = vld [vmem:[#allocation3 + $0x40] sm:$0xff]
      %v1269 = vld [vmem:[#allocation3 + $0x48] sm:$0xff]
      %v1270 = vld [vmem:[#allocation3 + $0x50] sm:$0xff]
      %v1271 = vld [vmem:[#allocation3 + $0x58] sm:$0xff]
      %v1272 = vld [vmem:[#allocation3 + $0x60] sm:$0xff]
      %v1273 = vld [vmem:[#allocation3 + $0x68] sm:$0xff]
      %v1274 = vld [vmem:[#allocation3 + $0x70] sm:$0xff]
      %v1275 = vld [vmem:[#allocation3 + $0x78] sm:$0xff]
      %v1276 = vld [vmem:[#allocation3 + $0x80] sm:$0xff]
      %v1277 = vld [vmem:[#allocation3 + $0x88] sm:$0xff]
      %v1278 = vld [vmem:[#allocation3 + $0x90] sm:$0xff]
      %v1279 = vld [vmem:[#allocation3 + $0x98] sm:$0xff]
      %v1280 = vld [vmem:[#allocation3 + $0xa0] sm:$0xff]
      %v1281 = vld [vmem:[#allocation3 + $0xa8] sm:$0xff]
      %v1282 = vld [vmem:[#allocation3 + $0xb0] sm:$0xff]
      %v1283 = vld [vmem:[#allocation3 + $0xb8] sm:$0xff]
      %v1284 = vld [vmem:[#allocation3 + $0xc0] sm:$0xff]
      %v1285 = vld [vmem:[#allocation3 + $0xc8] sm:$0xff]
      %v1286 = vld [vmem:[#allocation3 + $0xd0] sm:$0xff]
      %v1287 = vld [vmem:[#allocation3 + $0xd8] sm:$0xff]
      %v1288 = vld [vmem:[#allocation3 + $0xe0] sm:$0xff]
      %v1289 = vld [vmem:[#allocation3 + $0xe8] sm:$0xff]
      %v1290 = vld [vmem:[#allocation3 + $0xf0] sm:$0xff]
      %v1291 = vld [vmem:[#allocation3 + $0xf8] sm:$0xff]
      %v1292 = vld [vmem:[#allocation3 + $0x100] sm:$0xff]
      %v1293 = vld [vmem:[#allocation3 + $0x108] sm:$0xff]
      %v1294 = vld [vmem:[#allocation3 + $0x110] sm:$0xff]
      %v1295 = vld [vmem:[#allocation3 + $0x118] sm:$0xff]
      %v1297 = vsel %vm408, %v1257, 0
      %v1300 = vsel %vm408, %v1259, 0
      %1302 = vmatprep.subr.mxu0 %v1261
      %1303 = vmatpush1.msra.mxu0 %v1260
      %1304 = vmatprep.subr.mxu0 %v1263
      %1305 = vmatpush1.msra.mxu0 %v1262
      %1306 = vmatprep.subr.mxu0 %v1265
      %1307 = vmatpush1.msra.mxu0 %v1264
      %1308 = vmatprep.subr.mxu0 %v1267
      %1309 = vmatpush1.msra.mxu0 %v1266
      %1310 = vmatprep.subr.mxu0 %v1269
      %1311 = vmatpush1.msra.mxu0 %v1268
      %1312 = vmatprep.subr.mxu0 %v1271
      %1313 = vmatpush1.msra.mxu0 %v1270
      %1314 = vmatprep.subr.mxu0 %v1273
      %1315 = vmatpush1.msra.mxu0 %v1272
      %1316 = vmatprep.subr.mxu0 %v1275
      %1317 = vmatpush1.msra.mxu0 %v1274
      %1318 = vmatprep.subr.mxu0 %v1277
      %1319 = vmatpush1.msra.mxu0 %v1276
      %1320 = vmatprep.subr.mxu0 %v1279
      %1321 = vmatpush1.msra.mxu0 %v1278
      %1322 = vmatprep.subr.mxu0 %v1281
      %1323 = vmatpush1.msra.mxu0 %v1280
      %1324 = vmatprep.subr.mxu0 %v1283
      %1325 = vmatpush1.msra.mxu0 %v1282
      %1326 = vmatprep.subr.mxu0 %v1285
      %1327 = vmatpush1.msra.mxu0 %v1284
      %1328 = vmatprep.subr.mxu0 %v1287
      %1329 = vmatpush1.msra.mxu0 %v1286
      %1330 = vmatprep.subr.mxu0 %v1289
      %1331 = vmatpush1.msra.mxu0 %v1288
      %1332 = vmatprep.subr.mxu0 %v1291
      %1333 = vmatpush1.msra.mxu0 %v1290
      %1334 = vmatprep.subr.mxu0 %v1293
      %1335 = vmatpush1.msra.mxu0 %v1292
      %1336 = vmatprep.subr.mxu0 %v1295
      %1337 = vmatpush1.msra.mxu0 %v1294
      %1338 = vmatprep.subr.mxu0 0.0
      %1339 = vmatpush1.msra.mxu0 0.0
      %1340 = vmatprep.subr.mxu0 0.0
      %1341 = vmatpush1.msra.mxu0 0.0
      %1342 = vmatprep.subr.mxu0 0.0
      %1343 = vmatpush1.msra.mxu0 0.0
      %1344 = vmatprep.subr.mxu0 0.0
      %1345 = vmatpush1.msra.mxu0 0.0
      %1346 = vmatprep.subr.mxu0 0.0
      %1347 = vmatpush1.msra.mxu0 0.0
      %1348 = vmatprep.subr.mxu0 0.0
      %1349 = vmatpush1.msra.mxu0 0.0
      %1350 = vmatprep.subr.mxu0 0.0
      %1351 = vmatpush1.msra.mxu0 0.0
      %1352 = vmatprep.subr.mxu0 0.0
      %1353 = vmatpush1.msra.mxu0 0.0
      %1354 = vmatprep.subr.mxu0 0.0
      %1355 = vmatpush1.msra.mxu0 0.0
      %1356 = vmatprep.subr.mxu0 0.0
      %1357 = vmatpush1.msra.mxu0 0.0
      %1358 = vmatprep.subr.mxu0 0.0
      %1359 = vmatpush1.msra.mxu0 0.0
      %1360 = vmatprep.subr.mxu0 0.0
      %1361 = vmatpush1.msra.mxu0 0.0
      %1362 = vmatprep.subr.mxu0 0.0
      %1363 = vmatpush1.msra.mxu0 0.0
      %1364 = vmatprep.subr.mxu0 0.0
      %1365 = vmatpush1.msra.mxu0 0.0
      %1366 = vmatprep.mubr.f32.mxu0 %v1297
      %1367 = vmatmul.mubr.f32.gmra.mrb[0].mxu0 %v1256
      %v1368 = vpop.f32.mrb[0].mxu0
      %v1369 = vadd.f32 0.0, %v1368
      %v1370 = vpop.f32.mrb[0].mxu0
      %v1371 = vadd.f32 0.0, %v1370
      %1372 = vmatprep.mubr.f32.mxu0 %v1300
      %1373 = vmatmul.mubr.f32.gmra.mrb[0].mxu0 %v1258
      %v1374 = vpop.f32.mrb[0].mxu0
      %v1375 = vadd.f32 0.0, %v1374
      %v1376 = vpop.f32.mrb[0].mxu0
      %v1377 = vadd.f32 0.0, %v1376
      %1378 = vdwg.mxu0
      %v1379 = vadd.f32 %v1369, %v1371
      %1380 = vadd.xlane.f32.xlu0 %v1379
      %v1381 = vpop.xlane.xlu0 %1380
      %v1382 = vadd.f32 %v1375, %v1377
      %1383 = vadd.xlane.f32.xlu0 %v1382
      %v1384 = vpop.xlane.xlu0 %1383
      %v1385 = vmul.f32 %v1381, %v851
      %v1386 = vmul.f32 %v1384, %v851
      %v1387 = vsub.f32 %v1369, %v1385
      %v1388 = vsub.f32 %v1371, %v1385
      %v1389 = vsub.f32 %v1375, %v1386
      %v1390 = vsub.f32 %v1377, %v1386
      %v1391 = vmul.f32 %v1387, %v1387
      %v1392 = vmul.f32 %v1388, %v1388
      %v1393 = vmul.f32 %v1389, %v1389
      %v1394 = vmul.f32 %v1390, %v1390
      %v1395 = vadd.f32 %v1391, %v1392
      %1396 = vadd.xlane.f32.xlu0 %v1395
      %v1397 = vpop.xlane.xlu0 %1396
      %v1398 = vadd.f32 %v1393, %v1394
      %1399 = vadd.xlane.f32.xlu0 %v1398
      %v1400 = vpop.xlane.xlu0 %1399
      %v1401 = vmul.f32 %v1397, %v851
      %v1402 = vmul.f32 %v1400, %v851
      %v1403 = vld [vmem:[%s5] sm:$0xff]
      %v1404 = vld [vmem:[%s5 + $0x8] sm:$0xff]
      %v1405 = vadd.f32 %v1401, 1e-05
      %v1406 = vadd.f32 %v1402, 1e-05
      %v1407 = vrsqrt.pop %v1405
      %v1408 = vrsqrt.pop %v1406
      %v1409 = vmul.f32 %v1403, %v1407
      %v1410 = vmul.f32 %v1404, %v1408
      %1412 = vset.pattern.permute.xlu0 0
      %1413 = vperm.xlu0 %1412, %v1409
      %v1414 = vpop.permute.xlu0 %1413
      %1417 = vset.pattern.permute.xlu0 0
      %1418 = vperm.xlu0 %1417, %v1410
      %v1419 = vpop.permute.xlu0 %1418
      %v1421 = vmul.f32 %v1387, %v1414
      %v1422 = vmul.f32 %v1388, %v1414
      %v1423 = vmul.f32 %v1389, %v1419
      %v1424 = vmul.f32 %v1390, %v1419
      %v1425 = vld [vmem:[%s6] sm:$0xff]
      %v1426 = vld [vmem:[%s6 + $0x8] sm:$0xff]
      %1428 = vset.pattern.permute.xlu0 0
      %1429 = vperm.xlu0 %1428, %v1425
      %v1430 = vpop.permute.xlu0 %1429
      %1433 = vset.pattern.permute.xlu0 0
      %1434 = vperm.xlu0 %1433, %v1426
      %v1435 = vpop.permute.xlu0 %1434
      %v1437 = vadd.f32 %v1421, %v1430
      %v1438 = vadd.f32 %v1422, %v1430
      %v1439 = vadd.f32 %v1423, %v1435
      %v1440 = vadd.f32 %v1424, %v1435
      %vm1441 = vcmp.ge.f32.partialorder %v1437, 0.0
      %vm1442 = vcmp.ge.f32.partialorder %v1438, 0.0
      %vm1443 = vcmp.ge.f32.partialorder %v1439, 0.0
      %vm1444 = vcmp.ge.f32.partialorder %v1440, 0.0
      %v1445 = vmul.f32 %v1437, 0.01
      %v1446 = vmul.f32 %v1438, 0.01
      %v1447 = vmul.f32 %v1439, 0.01
      %v1448 = vmul.f32 %v1440, 0.01
      %v1449 = vsel %vm1441, %v1437, %v1445
      %v1450 = vsel %vm1442, %v1438, %v1446
      %v1451 = vsel %vm1443, %v1439, %v1447
      %v1452 = vsel %vm1444, %v1440, %v1448
      %v1453 = vadd.f32 %v1449, %v322
      %v1454 = vadd.f32 %v1450, %v323
      %v1455 = vadd.f32 %v1451, %v324
      %v1456 = vadd.f32 %v1452, %v325
      %1457 = vst [vmem:[%s278] sm:$0xff] %v1453
      %1458 = vst [vmem:[%s278 + $0x8] sm:$0xff] %v1454
      %1459 = vst [vmem:[%s278 + $0x10] sm:$0xff] %v1455
      %1460 = vst [vmem:[%s278 + $0x18] sm:$0xff] %v1456
      %p1461 = scmp.lt.s32.totalorder %s18, 1
      %s1462 = scalar_select %p1461, %s18, 1
      %s1463 = smul.addr %s1462, 4
      %s1464 = smul.addr %s1463, 8
      %s1465 = scalar_lea.vmem %s7, %s1464
      // Predicated region
      $region49: #{resblock_forward.1} parent=47 // pred_check
        %p1466 = pneg %p188
      $region50: #{resblock_forward.1} parent=47 // pred_check_branch
        %1468 = sbr.rel (%p1466) target = $region52
      $region51: #{resblock_forward.1} parent=47 // pred_region
        _
      $region52: #{resblock_forward.1} parent=47 // pred_fallthru
        _
    $region48: #{resblock_forward.1} parent=5 // pred_fallthru
      _
    %p1469 = scmp.le.s32.totalorder 2, %s13
    // Predicated region
    $region53: #{resblock_forward.1} parent=5 // pred_check
      %p1470 = pneg %p1469
    $region54: #{resblock_forward.1} parent=5 // pred_check_branch
      %1472 = sbr.rel (%p1470) target = $region56
    $region55: #{resblock_forward.1} parent=5 // pred_region
      %s1473 = ssub.s32 %s13, 2
      // Predicated region
      $region57: #{resblock_forward.1} parent=55 // pred_check
        %p1474 = pneg %p194
      $region58: #{resblock_forward.1} parent=55 // pred_check_branch
        %1476 = sbr.rel (%p1474) target = $region60
      $region59: #{resblock_forward.1} parent=55 // pred_region
        %p1477 = scmp.lt.s32.totalorder %s19, 1
        %s1478 = scalar_select %p1477, %s19, 1
        %s1479 = smul.addr %s1478, 4
        %s1480 = smul.addr %s1479, 8
        %s1481 = scalar_lea.vmem %s7, %s1480
      $region60: #{resblock_forward.1} parent=55 // pred_fallthru
        _
    $region56: #{resblock_forward.1} parent=5 // pred_fallthru
      _
  $region6: #{resblock_forward.1} parent=0 // loop_footer
    %s17 = sadd.s32 1, %s13
  $region7: #{resblock_forward.1} parent=0 // loop_footer_branch
    %12 = sbr.rel target = $region3
  $region8: #{resblock_forward.1} parent=0 // loop_exit
    _

</llo_original>
